<compile_context>
chip_gen: v6e
topology: v6e:2x2x1
jax: 0.10.0
libtpu: 0.0.40
codegen_flags: <defaults>
</compile_context>

<pallas_src>
import functools

import jax
import jax.numpy as jnp
from jax.experimental import pallas as pl
from jax.experimental.pallas import tpu as pltpu


def _round_up(x, m):
    return (x + m - 1) // m * m


# ----------------------------------------------------------------------------
# Fused Pallas kernel: L GNN layers + last-layer MLP readout
# ----------------------------------------------------------------------------
def _fused_scalegmn_kernel(x_ref, a_ref, eagg_ref, sel_ref, wbig_ref, b_ref,
                           w1_ref, b1_ref, w2_ref, b2_ref, out_ref, xcat_vmem,
                           *, d_pad, d_edge, num_graphs, last_layer_nodes):
    l = pl.program_id(0)

    # Layer 0: stage [x0 | e_agg] once into the VMEM-resident bf16 scratch.
    @pl.when(l == 0)
    def _init():
        xcat_vmem[:, pl.ds(0, d_pad)] = x_ref[...]
        xcat_vmem[:, pl.ds(d_pad, d_edge)] = eagg_ref[...]

    xe = xcat_vmem[...]                                   # [N_p, Kc] bf16

    # One wide bf16 MXU call; 128-lane-aligned column blocks:
    #   [:, 0:d_pad]       = x @ W_self + e_agg @ W_edge   (message term)
    #   [:, d_pad:2*d_pad] = x @ W_src                      (to be aggregated)
    #   [:, 2*d_pad:]      = x @ W_skip                     (skip connection)
    proj = jnp.dot(xe, wbig_ref[0], preferred_element_type=jnp.float32)
    u_msg = proj[:, :d_pad]
    u_src = proj[:, d_pad:2 * d_pad]
    skip = proj[:, 2 * d_pad:]

    # Reassociated aggregation A @ (x @ W_src); bf16 MXU with f32 accumulation.
    agg = jnp.dot(a_ref[...], u_src.astype(jnp.bfloat16),
                  preferred_element_type=jnp.float32)     # [N_p, d_pad]

    # x <- skip(x) + relu(x@W_self + (A@x)@W_src + e_agg@W_edge + b)
    x_new = skip + jnp.maximum(u_msg + agg + b_ref[0], 0.0)
    xcat_vmem[:, pl.ds(0, d_pad)] = x_new.astype(jnp.bfloat16)
    # update_edge_attr=False -> edge_attr unchanged; dropout(training=False) -> id.

    # Fused only_last_layer MLPNet readout on the final grid step. Last-layer rows
    # are gathered via one-hot selection matmuls (no M=1 dots), accumulated in f32,
    # and the [G, d_out] result is stored with ONE full-block write.
    @pl.when(l == pl.num_programs(0) - 1)
    def _readout():
        xf = xcat_vmem[...]                               # final [x | e_agg], bf16
        d_ro = b1_ref.shape[-1]
        acc = jnp.zeros((num_graphs, d_ro), jnp.float32)
        for j in range(last_layer_nodes):                 # static, small
            rows = jnp.dot(sel_ref[j], xf,
                           preferred_element_type=jnp.float32)       # [G, Kc]
            acc = acc + jnp.dot(rows.astype(jnp.bfloat16), w1_ref[j],
                                preferred_element_type=jnp.float32)  # [G, d_ro]
        h = jnp.maximum(acc + b1_ref[...], 0.0)
        out_ref[...] = (jnp.dot(h.astype(jnp.bfloat16), w2_ref[...],
                                preferred_element_type=jnp.float32) + b2_ref[...])


# ----------------------------------------------------------------------------
# pallas_call wrapper
# ----------------------------------------------------------------------------
def scalegmn_gnn_fw_pallas(params, x_pad, A_bf16, e_agg, sel, num_graphs):
    N_p, d_pad = x_pad.shape
    L, Kc, three_dpad = params['W_big'].shape
    d_edge = Kc - d_pad
    lln, _, d_ro = params['W1'].shape
    d_out = params['W2'].shape[1]

    kernel = functools.partial(
        _fused_scalegmn_kernel, d_pad=d_pad, d_edge=d_edge,
        num_graphs=num_graphs, last_layer_nodes=lln)

    flops = L * (2 * N_p * Kc * three_dpad + 2 * N_p * N_p * d_pad)
    flops += lln * (2 * num_graphs * N_p * Kc + 2 * num_graphs * Kc * d_ro)
    flops += 2 * num_graphs * d_ro * d_out
    bytes_accessed = (N_p * N_p * 2 + N_p * d_pad * 2 + N_p * d_edge * 2
                      + lln * num_graphs * N_p * 2
                      + L * (Kc * three_dpad * 2 + d_pad * 4)
                      + lln * Kc * d_ro * 2 + d_ro * 4 + d_ro * d_out * 2 + d_out * 4
                      + num_graphs * d_out * 4)

    return pl.pallas_call(
        kernel,
        out_shape=jax.ShapeDtypeStruct((num_graphs, d_out), jnp.float32),
        grid=(L,),
        in_specs=[
            pl.BlockSpec((N_p, d_pad), lambda l: (0, 0)),             # x0 (bf16, padded)
            pl.BlockSpec((N_p, N_p), lambda l: (0, 0)),               # A  (bf16)
            pl.BlockSpec((N_p, d_edge), lambda l: (0, 0)),            # e_agg (bf16)
            pl.BlockSpec((lln, num_graphs, N_p), lambda l: (0, 0, 0)),  # readout one-hots
            pl.BlockSpec((1, Kc, three_dpad), lambda l: (l, 0, 0)),   # fused W_big[l]
            pl.BlockSpec((1, 1, d_pad), lambda l: (l, 0, 0)),         # b[l]
            pl.BlockSpec((lln, Kc, d_ro), lambda l: (0, 0, 0)),       # W1 (padded blocks)
            pl.BlockSpec((1, d_ro), lambda l: (0, 0)),                # b1
            pl.BlockSpec((d_ro, d_out), lambda l: (0, 0)),            # W2
            pl.BlockSpec((1, d_out), lambda l: (0, 0)),               # b2
        ],
        out_specs=pl.BlockSpec((num_graphs, d_out), lambda l: (0, 0)),
        scratch_shapes=[pltpu.VMEM((N_p, Kc), jnp.bfloat16)],         # resident [x|e_agg]
        compiler_params=pltpu.CompilerParams(
            dimension_semantics=("arbitrary",),
            vmem_limit_bytes=32 * 1024 * 1024),
        cost_estimate=pl.CostEstimate(flops=flops, transcendentals=0,
                                      bytes_accessed=bytes_accessed),
    )(x_pad, A_bf16, e_agg, sel,
      params['W_big'], params['b'],
      params['W1'], params['b1'], params['W2'], params['b2'])


# ----------------------------------------------------------------------------
# Parameter init (deterministic, nn.Linear-style uniform), fused & lane-padded
# ----------------------------------------------------------------------------
def _linear_init(key, fan_in, fan_out):
    lim = 1.0 / jnp.sqrt(jnp.float32(fan_in))
    return jax.random.uniform(key, (fan_in, fan_out), jnp.float32, -lim, lim)


def init_params(key, num_layers, d_node, d_edge, d_hid,
                last_layer_nodes, d_hid_readout, d_out_readout):
    # skip_layers = Linear(d_hid, d_hid) applied to x at every layer -> d_node == d_hid
    assert d_node == d_hid, "forward ScaleGMN skip connections require d_node == d_hid"
    d_pad = _round_up(d_hid, 128)            # lane-tile-aligned column blocks
    Kc = d_pad + d_edge                      # fused LHS width: [x | e_agg]
    keys = iter(jax.random.split(key, num_layers * 5 + 4))
    w_big, bias = [], []
    for _ in range(num_layers):
        w_self = _linear_init(next(keys), d_hid, d_hid)
        w_src = _linear_init(next(keys), d_hid, d_hid)
        w_e = _linear_init(next(keys), d_edge, d_hid)
        b = jax.random.uniform(next(keys), (1, d_hid), jnp.float32, -0.05, 0.05)
        w_skip = _linear_init(next(keys), d_hid, d_hid)
        # Fused, 128-column-aligned layer weight:
        #   rows 0:d_hid            -> [W_self | W_src | W_skip]
        #   rows d_pad:d_pad+d_edge -> [W_edge |   0   |   0   ]
        wb = jnp.zeros((Kc, 3 * d_pad), jnp.float32)
        wb = wb.at[:d_hid, 0:d_hid].set(w_self)
        wb = wb.at[:d_hid, d_pad:d_pad + d_hid].set(w_src)
        wb = wb.at[:d_hid, 2 * d_pad:2 * d_pad + d_hid].set(w_skip)
        wb = wb.at[d_pad:d_pad + d_edge, 0:d_hid].set(w_e)
        w_big.append(wb.astype(jnp.bfloat16))
        bias.append(jnp.zeros((1, d_pad), jnp.float32).at[:, :d_hid].set(b))
    # only_last_layer MLPNet readout: relu(nf @ W1 + b1) @ W2 + b2
    w1 = _linear_init(next(keys), last_layer_nodes * d_hid, d_hid_readout)
    w1_pad = jnp.zeros((last_layer_nodes, Kc, d_hid_readout), jnp.float32)
    for j in range(last_layer_nodes):
        w1_pad = w1_pad.at[j, :d_hid, :].set(w1[j * d_hid:(j + 1) * d_hid])
    return {
        'W_big': jnp.stack(w_big),                          # [L, Kc, 3*d_pad]  bf16
        'b': jnp.stack(bias),                               # [L, 1, d_pad]     f32
        'W1': w1_pad.astype(jnp.bfloat16),                  # [lln, Kc, d_ro]   bf16
        'b1': jax.random.uniform(next(keys), (1, d_hid_readout), jnp.float32,
                                 -0.05, 0.05),
        'W2': _linear_init(next(keys), d_hid_readout,
                           d_out_readout).astype(jnp.bfloat16),
        'b2': jax.random.uniform(next(keys), (1, d_out_readout), jnp.float32,
                                 -0.05, 0.05),
    }


# ----------------------------------------------------------------------------
# Forward pass (ScaleGMN_GNN_fw.forward, eval mode, only_last_layer readout)
# ----------------------------------------------------------------------------
def scalegmn_gnn_fw_forward(params, x, edge_index, edge_attr,
                            num_graphs, num_nodes, last_layer_nodes):
    N, d_hid = x.shape
    assert N == num_graphs * num_nodes
    _, Kc, three_dpad = params['W_big'].shape
    d_pad = three_dpad // 3
    d_edge = Kc - d_pad
    N_p = _round_up(N, 16)                   # bf16 sublane packing (16 rows / vreg)

    src, dst = edge_index[0], edge_index[1]
    # TODO(synk): PyG scatter-add message passing has no clean Pallas/TPU equivalent;
    # densify adjacency + pre-aggregate edge features ONCE in JAX glue (loop-invariant).
    A = jnp.zeros((N_p, N_p), jnp.float32).at[dst, src].add(1.0).astype(jnp.bfloat16)
    e_agg = (jnp.zeros((N_p, d_edge), jnp.float32).at[dst].add(edge_attr)
             .astype(jnp.bfloat16))
    x_pad = (jnp.zeros((N_p, d_pad), jnp.float32).at[:N, :d_hid].set(x)
             .astype(jnp.bfloat16))

    # One-hot row selectors for each graph's last-layer nodes; the in-kernel readout
    # gather is done as tiny MXU matmuls instead of per-row loads / M=1 dots.
    off = num_nodes - last_layer_nodes
    sel = jnp.zeros((last_layer_nodes, num_graphs, N_p), jnp.float32)
    for j in range(last_layer_nodes):
        for g in range(num_graphs):
            sel = sel.at[j, g, g * num_nodes + off + j].set(1.0)
    sel = sel.astype(jnp.bfloat16)

    return scalegmn_gnn_fw_pallas(params, x_pad, A, e_agg, sel, num_graphs)


# ----------------------------------------------------------------------------
# Demo
# ----------------------------------------------------------------------------
if __name__ == "__main__":
    key = jax.random.PRNGKey(0)

    # "neuron graph" of a small MLP: layer_layout = [2, 4, 3]
    layer_layout = [2, 4, 3]
    layer_idx = [0, 2, 6, 9]                          # cumulative node indices
    nodes_per_graph = layer_idx[-1]                   # 9
    num_graphs = 2
    N = num_graphs * nodes_per_graph                  # 18
    last_layer_nodes = layer_idx[-1] - layer_idx[-2]  # 3

    num_layers = 3
    d_node = 32      # == d_hid so skip connections type-check (as in the PyTorch code)
    d_edge = 8
    d_hid = 32
    d_out_readout = 8
    d_hid_readout = d_hid

    # fully-connected edges between consecutive MLP layers, per graph
    srcs, dsts = [], []
    for g in range(num_graphs):
        offset = g * nodes_per_graph
        for li in range(len(layer_layout) - 1):
            for s in range(layer_idx[li], layer_idx[li + 1]):
                for d in range(layer_idx[li + 1], layer_idx[li + 2]):
                    srcs.append(offset + s)
                    dsts.append(offset + d)
    edge_index = jnp.array([srcs, dsts], dtype=jnp.int32)    # [2, E], E = 40

    k_x, k_e, k_p = jax.random.split(key, 3)
    x = jax.random.normal(k_x, (N, d_node), jnp.float32)
    edge_attr = jax.random.normal(k_e, (edge_index.shape[1], d_edge), jnp.float32)

    params = init_params(k_p, num_layers, d_node, d_edge, d_hid,
                         last_layer_nodes, d_hid_readout, d_out_readout)

    graph_features = scalegmn_gnn_fw_forward(
        params, x, edge_index, edge_attr,
        num_graphs=num_graphs, num_nodes=nodes_per_graph,
        last_layer_nodes=last_layer_nodes)
    graph_features = jax.block_until_ready(graph_features)

    assert graph_features.shape == (num_graphs, d_out_readout)
    assert bool(jnp.all(jnp.isfinite(graph_features)))
    print("KERNEL_OK")
</pallas_src>

<mosaic_0001>
module attributes {stable_mosaic.version = 11 : i64} {
  func.func @_fused_scalegmn_kernel(%arg0: i32, %arg1: memref<32x128xbf16, #tpu.memory_space<vmem>>, %arg2: memref<32x32xbf16, #tpu.memory_space<vmem>>, %arg3: memref<32x8xbf16, #tpu.memory_space<vmem>>, %arg4: memref<3x2x32xbf16, #tpu.memory_space<vmem>>, %arg5: memref<1x136x384xbf16, #tpu.memory_space<vmem>>, %arg6: memref<1x1x128xf32, #tpu.memory_space<vmem>>, %arg7: memref<3x136x32xbf16, #tpu.memory_space<vmem>>, %arg8: memref<1x32xf32, #tpu.memory_space<vmem>>, %arg9: memref<32x8xbf16, #tpu.memory_space<vmem>>, %arg10: memref<1x8xf32, #tpu.memory_space<vmem>>, %arg11: memref<2x8xf32, #tpu.memory_space<vmem>>, %arg12: memref<32x136xbf16, #tpu.memory_space<vmem>>) attributes {dimension_semantics = [#tpu.dimension_semantics<arbitrary>], iteration_bounds = array<i64: 3>, scalar_prefetch = 0 : i64, scratch_operands = 1 : i64, tpu.core_type = #tpu.core_type<tc>, window_params = [{pipeline_mode = #tpu.pipeline_mode<synchronous>, transform_indices = @transform_0, window_bounds = array<i64: 32, 128>}, {pipeline_mode = #tpu.pipeline_mode<synchronous>, transform_indices = @transform_1, window_bounds = array<i64: 32, 32>}, {pipeline_mode = #tpu.pipeline_mode<synchronous>, transform_indices = @transform_2, window_bounds = array<i64: 32, 8>}, {pipeline_mode = #tpu.pipeline_mode<synchronous>, transform_indices = @transform_3, window_bounds = array<i64: 3, 2, 32>}, {transform_indices = @transform_4, window_bounds = array<i64: 1, 136, 384>}, {transform_indices = @transform_5, window_bounds = array<i64: 1, 1, 128>}, {pipeline_mode = #tpu.pipeline_mode<synchronous>, transform_indices = @transform_6, window_bounds = array<i64: 3, 136, 32>}, {pipeline_mode = #tpu.pipeline_mode<synchronous>, transform_indices = @transform_7, window_bounds = array<i64: 1, 32>}, {pipeline_mode = #tpu.pipeline_mode<synchronous>, transform_indices = @transform_8, window_bounds = array<i64: 32, 8>}, {pipeline_mode = #tpu.pipeline_mode<synchronous>, transform_indices = @transform_9, window_bounds = array<i64: 1, 8>}, {pipeline_mode = #tpu.pipeline_mode<synchronous>, transform_indices = @transform_10, window_bounds = array<i64: 2, 8>}]} {
    %c0_i32 = arith.constant 0 : i32
    %0 = arith.cmpi eq, %arg0, %c0_i32 : i32
    %1 = arith.extui %0 : i1 to i32
    %c0_i32_0 = arith.constant 0 : i32
    %2 = arith.cmpi ne, %1, %c0_i32_0 : i32
    scf.if %2 {
      %c0_15 = arith.constant 0 : index
      %c0_16 = arith.constant 0 : index
      %26 = vector.load %arg1[%c0_15, %c0_16] : memref<32x128xbf16, #tpu.memory_space<vmem>>, vector<32x128xbf16>
      %c0_17 = arith.constant 0 : index
      %c0_18 = arith.constant 0 : index
      %27 = vector.load %arg12[%c0_17, %c0_18] : memref<32x136xbf16, #tpu.memory_space<vmem>>, vector<32x128xbf16>
      tpu.vector_store %arg12[%c0_17, %c0_18], %26 {strides = array<i32>} : memref<32x136xbf16, #tpu.memory_space<vmem>>, vector<32x128xbf16>,
      %c0_19 = arith.constant 0 : index
      %c0_20 = arith.constant 0 : index
      %28 = vector.load %arg3[%c0_19, %c0_20] : memref<32x8xbf16, #tpu.memory_space<vmem>>, vector<32x8xbf16>
      %c0_21 = arith.constant 0 : index
      %c128 = arith.constant 128 : index
      %29 = vector.load %arg12[%c0_21, %c128] : memref<32x136xbf16, #tpu.memory_space<vmem>>, vector<32x8xbf16>
      tpu.vector_store %arg12[%c0_21, %c128], %28 {strides = array<i32>} : memref<32x136xbf16, #tpu.memory_space<vmem>>, vector<32x8xbf16>,
    } else {
    }
    %c0 = arith.constant 0 : index
    %c0_1 = arith.constant 0 : index
    %3 = vector.load %arg12[%c0, %c0_1] : memref<32x136xbf16, #tpu.memory_space<vmem>>, vector<32x136xbf16>
    %c0_2 = arith.constant 0 : index
    %c0_3 = arith.constant 0 : index
    %c0_4 = arith.constant 0 : index
    %4 = vector.load %arg5[%c0_2, %c0_3, %c0_4] : memref<1x136x384xbf16, #tpu.memory_space<vmem>>, vector<1x136x384xbf16>
    %5 = vector.shape_cast %4 : vector<1x136x384xbf16> to vector<136x384xbf16>
    %cst = arith.constant dense<0.000000e+00> : vector<32x384xf32>
    %6 = tpu.matmul %3, %5, %cst {dimension_numbers = #tpu.dot_dimension_numbers<[1], [0], [0], [1], [0, 0, 1, 1], [], []>} : vector<32x136xbf16>, vector<136x384xbf16>, vector<32x384xf32> -> vector<32x384xf32>
    %7 = vector.extract_strided_slice %6 {offsets = [0, 0], sizes = [32, 128], strides = [1, 1]} : vector<32x384xf32> to vector<32x128xf32>
    %8 = vector.extract_strided_slice %6 {offsets = [0, 128], sizes = [32, 128], strides = [1, 1]} : vector<32x384xf32> to vector<32x128xf32>
    %9 = vector.extract_strided_slice %6 {offsets = [0, 256], sizes = [32, 128], strides = [1, 1]} : vector<32x384xf32> to vector<32x128xf32>
    %c0_5 = arith.constant 0 : index
    %c0_6 = arith.constant 0 : index
    %10 = vector.load %arg2[%c0_5, %c0_6] : memref<32x32xbf16, #tpu.memory_space<vmem>>, vector<32x32xbf16>
    %11 = arith.truncf %8 : vector<32x128xf32> to vector<32x128xbf16>
    %cst_7 = arith.constant dense<0.000000e+00> : vector<32x128xf32>
    %12 = tpu.matmul %10, %11, %cst_7 {dimension_numbers = #tpu.dot_dimension_numbers<[1], [0], [0], [1], [0, 0, 1, 1], [], []>} : vector<32x32xbf16>, vector<32x128xbf16>, vector<32x128xf32> -> vector<32x128xf32>
    %13 = arith.addf %7, %12 : vector<32x128xf32>
    %c0_8 = arith.constant 0 : index
    %c0_9 = arith.constant 0 : index
    %c0_10 = arith.constant 0 : index
    %14 = vector.load %arg6[%c0_8, %c0_9, %c0_10] : memref<1x1x128xf32, #tpu.memory_space<vmem>>, vector<1x1x128xf32>
    %15 = vector.shape_cast %14 : vector<1x1x128xf32> to vector<1x128xf32>
    %16 = vector.broadcast %15 : vector<1x128xf32> to vector<32x128xf32>
    %17 = arith.addf %13, %16 : vector<32x128xf32>
    %cst_11 = arith.constant 0.000000e+00 : f32
    %18 = vector.broadcast %cst_11 : f32 to vector<32x128xf32>
    %19 = arith.maximumf %17, %18 : vector<32x128xf32>
    %20 = arith.addf %9, %19 : vector<32x128xf32>
    %21 = arith.truncf %20 : vector<32x128xf32> to vector<32x128xbf16>
    %c0_12 = arith.constant 0 : index
    %c0_13 = arith.constant 0 : index
    %22 = vector.load %arg12[%c0_12, %c0_13] : memref<32x136xbf16, #tpu.memory_space<vmem>>, vector<32x128xbf16>
    tpu.vector_store %arg12[%c0_12, %c0_13], %21 {strides = array<i32>} : memref<32x136xbf16, #tpu.memory_space<vmem>>, vector<32x128xbf16>,
    %c2_i32 = arith.constant 2 : i32
    %23 = arith.cmpi eq, %arg0, %c2_i32 : i32
    %24 = arith.extui %23 : i1 to i32
    %c0_i32_14 = arith.constant 0 : i32
    %25 = arith.cmpi ne, %24, %c0_i32_14 : i32
    scf.if %25 {
      %c0_15 = arith.constant 0 : index
      %c0_16 = arith.constant 0 : index
      %26 = vector.load %arg12[%c0_15, %c0_16] : memref<32x136xbf16, #tpu.memory_space<vmem>>, vector<32x136xbf16>
      %cst_17 = arith.constant 0.000000e+00 : f32
      %27 = vector.broadcast %cst_17 : f32 to vector<2x32xf32>
      %c0_18 = arith.constant 0 : index
      %c0_19 = arith.constant 0 : index
      %c0_20 = arith.constant 0 : index
      %28 = vector.load %arg4[%c0_18, %c0_19, %c0_20] : memref<3x2x32xbf16, #tpu.memory_space<vmem>>, vector<1x2x32xbf16>
      %29 = vector.shape_cast %28 : vector<1x2x32xbf16> to vector<2x32xbf16>
      %cst_21 = arith.constant dense<0.000000e+00> : vector<2x136xf32>
      %30 = tpu.matmul %29, %26, %cst_21 {dimension_numbers = #tpu.dot_dimension_numbers<[1], [0], [0], [1], [0, 0, 1, 1], [], []>} : vector<2x32xbf16>, vector<32x136xbf16>, vector<2x136xf32> -> vector<2x136xf32>
      %31 = arith.truncf %30 : vector<2x136xf32> to vector<2x136xbf16>
      %c0_22 = arith.constant 0 : index
      %c0_23 = arith.constant 0 : index
      %c0_24 = arith.constant 0 : index
      %32 = vector.load %arg7[%c0_22, %c0_23, %c0_24] : memref<3x136x32xbf16, #tpu.memory_space<vmem>>, vector<1x136x32xbf16>
      %33 = vector.shape_cast %32 : vector<1x136x32xbf16> to vector<136x32xbf16>
      %cst_25 = arith.constant dense<0.000000e+00> : vector<2x32xf32>
      %34 = tpu.matmul %31, %33, %cst_25 {dimension_numbers = #tpu.dot_dimension_numbers<[1], [0], [0], [1], [0, 0, 1, 1], [], []>} : vector<2x136xbf16>, vector<136x32xbf16>, vector<2x32xf32> -> vector<2x32xf32>
      %35 = arith.addf %27, %34 : vector<2x32xf32>
      %c1 = arith.constant 1 : index
      %c0_26 = arith.constant 0 : index
      %c0_27 = arith.constant 0 : index
      %36 = vector.load %arg4[%c1, %c0_26, %c0_27] : memref<3x2x32xbf16, #tpu.memory_space<vmem>>, vector<1x2x32xbf16>
      %37 = vector.shape_cast %36 : vector<1x2x32xbf16> to vector<2x32xbf16>
      %cst_28 = arith.constant dense<0.000000e+00> : vector<2x136xf32>
      %38 = tpu.matmul %37, %26, %cst_28 {dimension_numbers = #tpu.dot_dimension_numbers<[1], [0], [0], [1], [0, 0, 1, 1], [], []>} : vector<2x32xbf16>, vector<32x136xbf16>, vector<2x136xf32> -> vector<2x136xf32>
      %39 = arith.truncf %38 : vector<2x136xf32> to vector<2x136xbf16>
      %c1_29 = arith.constant 1 : index
      %c0_30 = arith.constant 0 : index
      %c0_31 = arith.constant 0 : index
      %40 = vector.load %arg7[%c1_29, %c0_30, %c0_31] : memref<3x136x32xbf16, #tpu.memory_space<vmem>>, vector<1x136x32xbf16>
      %41 = vector.shape_cast %40 : vector<1x136x32xbf16> to vector<136x32xbf16>
      %cst_32 = arith.constant dense<0.000000e+00> : vector<2x32xf32>
      %42 = tpu.matmul %39, %41, %cst_32 {dimension_numbers = #tpu.dot_dimension_numbers<[1], [0], [0], [1], [0, 0, 1, 1], [], []>} : vector<2x136xbf16>, vector<136x32xbf16>, vector<2x32xf32> -> vector<2x32xf32>
      %43 = arith.addf %35, %42 : vector<2x32xf32>
      %c2 = arith.constant 2 : index
      %c0_33 = arith.constant 0 : index
      %c0_34 = arith.constant 0 : index
      %44 = vector.load %arg4[%c2, %c0_33, %c0_34] : memref<3x2x32xbf16, #tpu.memory_space<vmem>>, vector<1x2x32xbf16>
      %45 = vector.shape_cast %44 : vector<1x2x32xbf16> to vector<2x32xbf16>
      %cst_35 = arith.constant dense<0.000000e+00> : vector<2x136xf32>
      %46 = tpu.matmul %45, %26, %cst_35 {dimension_numbers = #tpu.dot_dimension_numbers<[1], [0], [0], [1], [0, 0, 1, 1], [], []>} : vector<2x32xbf16>, vector<32x136xbf16>, vector<2x136xf32> -> vector<2x136xf32>
      %47 = arith.truncf %46 : vector<2x136xf32> to vector<2x136xbf16>
      %c2_36 = arith.constant 2 : index
      %c0_37 = arith.constant 0 : index
      %c0_38 = arith.constant 0 : index
      %48 = vector.load %arg7[%c2_36, %c0_37, %c0_38] : memref<3x136x32xbf16, #tpu.memory_space<vmem>>, vector<1x136x32xbf16>
      %49 = vector.shape_cast %48 : vector<1x136x32xbf16> to vector<136x32xbf16>
      %cst_39 = arith.constant dense<0.000000e+00> : vector<2x32xf32>
      %50 = tpu.matmul %47, %49, %cst_39 {dimension_numbers = #tpu.dot_dimension_numbers<[1], [0], [0], [1], [0, 0, 1, 1], [], []>} : vector<2x136xbf16>, vector<136x32xbf16>, vector<2x32xf32> -> vector<2x32xf32>
      %51 = arith.addf %43, %50 : vector<2x32xf32>
      %c0_40 = arith.constant 0 : index
      %c0_41 = arith.constant 0 : index
      %52 = vector.load %arg8[%c0_40, %c0_41] : memref<1x32xf32, #tpu.memory_space<vmem>>, vector<1x32xf32>
      %53 = vector.broadcast %52 : vector<1x32xf32> to vector<2x32xf32>
      %54 = arith.addf %51, %53 : vector<2x32xf32>
      %cst_42 = arith.constant 0.000000e+00 : f32
      %55 = vector.broadcast %cst_42 : f32 to vector<2x32xf32>
      %56 = arith.maximumf %54, %55 : vector<2x32xf32>
      %57 = arith.truncf %56 : vector<2x32xf32> to vector<2x32xbf16>
      %c0_43 = arith.constant 0 : index
      %c0_44 = arith.constant 0 : index
      %58 = vector.load %arg9[%c0_43, %c0_44] : memref<32x8xbf16, #tpu.memory_space<vmem>>, vector<32x8xbf16>
      %cst_45 = arith.constant dense<0.000000e+00> : vector<2x8xf32>
      %59 = tpu.matmul %57, %58, %cst_45 {dimension_numbers = #tpu.dot_dimension_numbers<[1], [0], [0], [1], [0, 0, 1, 1], [], []>} : vector<2x32xbf16>, vector<32x8xbf16>, vector<2x8xf32> -> vector<2x8xf32>
      %c0_46 = arith.constant 0 : index
      %c0_47 = arith.constant 0 : index
      %60 = vector.load %arg10[%c0_46, %c0_47] : memref<1x8xf32, #tpu.memory_space<vmem>>, vector<1x8xf32>
      %61 = vector.broadcast %60 : vector<1x8xf32> to vector<2x8xf32>
      %62 = arith.addf %59, %61 : vector<2x8xf32>
      %c0_48 = arith.constant 0 : index
      %c0_49 = arith.constant 0 : index
      %63 = vector.load %arg11[%c0_48, %c0_49] : memref<2x8xf32, #tpu.memory_space<vmem>>, vector<2x8xf32>
      tpu.vector_store %arg11[%c0_48, %c0_49], %62 {strides = array<i32>} : memref<2x8xf32, #tpu.memory_space<vmem>>, vector<2x8xf32>,
    } else {
    }
    return
  }
  func.func @transform_0(%arg0: i32) -> (i32, i32) {
    %c0_i32 = arith.constant 0 : i32
    %c0_i32_0 = arith.constant 0 : i32
    %c0_i32_1 = arith.constant 0 : i32
    return %c0_i32, %c0_i32_0 : i32, i32
  }
  func.func @transform_1(%arg0: i32) -> (i32, i32) {
    %c0_i32 = arith.constant 0 : i32
    %c0_i32_0 = arith.constant 0 : i32
    %c0_i32_1 = arith.constant 0 : i32
    return %c0_i32, %c0_i32_0 : i32, i32
  }
  func.func @transform_2(%arg0: i32) -> (i32, i32) {
    %c0_i32 = arith.constant 0 : i32
    %c0_i32_0 = arith.constant 0 : i32
    %c0_i32_1 = arith.constant 0 : i32
    return %c0_i32, %c0_i32_0 : i32, i32
  }
  func.func @transform_3(%arg0: i32) -> (i32, i32, i32) {
    %c0_i32 = arith.constant 0 : i32
    %c0_i32_0 = arith.constant 0 : i32
    %c0_i32_1 = arith.constant 0 : i32
    %c0_i32_2 = arith.constant 0 : i32
    return %c0_i32, %c0_i32_0, %c0_i32_1 : i32, i32, i32
  }
  func.func @transform_4(%arg0: i32) -> (i32, i32, i32) {
    %c0_i32 = arith.constant 0 : i32
    %c0_i32_0 = arith.constant 0 : i32
    %c0_i32_1 = arith.constant 0 : i32
    return %arg0, %c0_i32, %c0_i32_0 : i32, i32, i32
  }
  func.func @transform_5(%arg0: i32) -> (i32, i32, i32) {
    %c0_i32 = arith.constant 0 : i32
    %c0_i32_0 = arith.constant 0 : i32
    %c0_i32_1 = arith.constant 0 : i32
    return %arg0, %c0_i32, %c0_i32_0 : i32, i32, i32
  }
  func.func @transform_6(%arg0: i32) -> (i32, i32, i32) {
    %c0_i32 = arith.constant 0 : i32
    %c0_i32_0 = arith.constant 0 : i32
    %c0_i32_1 = arith.constant 0 : i32
    %c0_i32_2 = arith.constant 0 : i32
    return %c0_i32, %c0_i32_0, %c0_i32_1 : i32, i32, i32
  }
  func.func @transform_7(%arg0: i32) -> (i32, i32) {
    %c0_i32 = arith.constant 0 : i32
    %c0_i32_0 = arith.constant 0 : i32
    %c0_i32_1 = arith.constant 0 : i32
    return %c0_i32, %c0_i32_0 : i32, i32
  }
  func.func @transform_8(%arg0: i32) -> (i32, i32) {
    %c0_i32 = arith.constant 0 : i32
    %c0_i32_0 = arith.constant 0 : i32
    %c0_i32_1 = arith.constant 0 : i32
    return %c0_i32, %c0_i32_0 : i32, i32
  }
  func.func @transform_9(%arg0: i32) -> (i32, i32) {
    %c0_i32 = arith.constant 0 : i32
    %c0_i32_0 = arith.constant 0 : i32
    %c0_i32_1 = arith.constant 0 : i32
    return %c0_i32, %c0_i32_0 : i32, i32
  }
  func.func @transform_10(%arg0: i32) -> (i32, i32) {
    %c0_i32 = arith.constant 0 : i32
    %c0_i32_0 = arith.constant 0 : i32
    %c0_i32_1 = arith.constant 0 : i32
    return %c0_i32, %c0_i32_0 : i32, i32
  }
}

</mosaic_0001>

<llo_original>
// kernel: tpu_custom_call.1
$region0: #{tpu_custom_call.1}
  #allocation0 [shape = 'u32[]', space=smem, size = 0x4, offset = 0x4, fixed_abs, tag = 'smem constant byte address 0x4 - core index']
  #allocation1 [shape = 'u32[144,128]{1,0:T(1,128)}', space=vmem, size = 0x12000, scoped, tag = 'internal scratch']
  #allocation2 [shape = 'bf16[32,136]{1,0:T(8,128)(2,1)}', space=vmem, size = 0x4000, scoped, tag = 'scratch operand']
  %s0 = inlined_call_operand.vmem [shape: bf16[32,128], index: 0, kind: input, shape index: {}]
  %s1 = inlined_call_operand.vmem [shape: bf16[32,32], index: 1, kind: input, shape index: {}]
  %s2 = inlined_call_operand.vmem [shape: bf16[32,8], index: 2, kind: input, shape index: {}]
  %s3 = inlined_call_operand.vmem [shape: bf16[3,2,32], index: 3, kind: input, shape index: {}]
  %s4 = inlined_call_operand.hbm [shape: bf16[3,136,384], index: 4, kind: input, shape index: {}]
  %s5 = inlined_call_operand.vmem [shape: f32[3,1,128], index: 5, kind: input, shape index: {}]
  %s6 = inlined_call_operand.vmem [shape: bf16[3,136,32], index: 6, kind: input, shape index: {}]
  %s7 = inlined_call_operand.vmem [shape: f32[1,32], index: 7, kind: input, shape index: {}]
  %s8 = inlined_call_operand.vmem [shape: bf16[32,8], index: 8, kind: input, shape index: {}]
  %s9 = inlined_call_operand.vmem [shape: f32[1,8], index: 9, kind: input, shape index: {}]
  %s10 = inlined_call_operand.hbm [shape: f32[2,8], index: 10, kind: output, shape index: {}]
  %s11 = sld [smem:[#allocation0]]
  $region85: #{tpu_custom_call.1} parent=0
    _
  %s13 = ssub.s32 1, %s11
  %s14 = scalar_select 0, %s13, %s11
  $region1: #{tpu_custom_call.1} parent=0
    #allocation3 [shape = 'u8[208896]{0}', space=vmem, size = 0x33000, scoped, tag = 'input window, operand 4']
    #allocation4 [shape = 's32[2]{0}', space=sflag, size = 0x8, scoped, tag = 'scoped memory for tpu_custom_call.1']
    #allocation5 [shape = 's32[2]{0}', space=sflag, size = 0x8, scoped, tag = 'scoped memory for tpu_custom_call.1']
    #allocation6 [shape = 'u8[1024]{0}', space=vmem, size = 0x400, scoped, tag = 'output window, operand 0, single buffered']
    %15 = vsyncpa [#allocation4], 0
    %s16 = scalar_lea.sflag [#allocation4], 1
    %17 = vsyncpa %s16, 0
    %18 = vsyncpa [#allocation5], 0
    loop: start=0, step=1, limit=5
    $region2: #{tpu_custom_call.1} parent=1 // loop_pre_header
      _
    $region3: #{tpu_custom_call.1} parent=1 // loop_header
      %s20 = sphi 0, %s24
      %p21 = scmp.ge.s32.totalorder %s20, 5
      %s28 = sphi 0, %s28
      %s30 = sphi 0, %s28
      %s31 = sphi 0, %s30
      %s45 = sphi 0, %s31
      %s49 = sphi 0, %s49
      %s51 = sphi 0, %s49
      %s52 = sphi 0, %s51
      %s66 = sphi 0, %s52
      %s70 = sphi 0, %s70
      %s72 = sphi 0, %s70
      %s73 = sphi 0, %s72
      %s87 = sphi 0, %s73
      %s91 = sphi 0, %s91
      %s93 = sphi 0, %s91
      %s94 = sphi 0, %s93
      %s108 = sphi 0, %s94
      %s114 = sphi 0, %s116
      %s117 = sphi 0, %s114
      %s118 = sphi 0, %s117
      %s134 = sphi 0, %s118
      %s140 = sphi 0, %s142
      %s143 = sphi 0, %s140
      %s144 = sphi 0, %s143
      %s160 = sphi 0, %s144
      %s164 = sphi 0, %s164
      %s166 = sphi 0, %s164
      %s167 = sphi 0, %s166
      %s181 = sphi 0, %s167
      %s185 = sphi 0, %s185
      %s187 = sphi 0, %s185
      %s188 = sphi 0, %s187
      %s202 = sphi 0, %s188
      %s206 = sphi 0, %s206
      %s208 = sphi 0, %s206
      %s209 = sphi 0, %s208
      %s223 = sphi 0, %s209
      %s227 = sphi 0, %s227
      %s229 = sphi 0, %s227
      %s230 = sphi 0, %s229
      %s244 = sphi 0, %s230
      %s248 = sphi 0, %s248
      %s250 = sphi 0, %s248
      %s251 = sphi 0, %s250
      %s265 = sphi 0, %s251
    $region4: #{tpu_custom_call.1} parent=1 // loop_header_branch
      %23 = sbr.rel (%p21) target = $region8
    $region5: #{tpu_custom_call.1} parent=1 // loop_body
      %s25 = ssub.s32 %s20, 1
      %s26 = ssub.s32 %s20, 2
      %s27 = sadd.s32 %s20, 1
      %s29 = sadd.s32 %s28, 1
      %p32 = scmp.eq.s32.totalorder %s20, 2
      %p33 = scmp.ne.s32.totalorder %s28, %s30
      %p34 = scmp.eq.s32.totalorder %s20, 0
      %p35 = por %p33, %p34
      %p36 = scmp.ne.s32.totalorder %s28, %s30
      %p37 = scmp.eq.s32.totalorder %s25, 2
      %p38 = por %p36, %p37
      %p39 = scmp.ne.s32.totalorder %s30, %s31
      %p40 = scmp.eq.s32.totalorder %s25, 0
      %p41 = por %p39, %p40
      %p42 = scmp.ne.s32.totalorder %s30, %s31
      %p43 = scmp.eq.s32.totalorder %s26, 2
      %p44 = por %p42, %p43
      %p46 = scmp.ne.s32.totalorder %s31, %s45
      %p47 = scmp.eq.s32.totalorder %s26, 0
      %p48 = por %p46, %p47
      %s50 = sadd.s32 %s49, 1
      %p53 = scmp.eq.s32.totalorder %s20, 2
      %p54 = scmp.ne.s32.totalorder %s49, %s51
      %p55 = scmp.eq.s32.totalorder %s20, 0
      %p56 = por %p54, %p55
      %p57 = scmp.ne.s32.totalorder %s49, %s51
      %p58 = scmp.eq.s32.totalorder %s25, 2
      %p59 = por %p57, %p58
      %p60 = scmp.ne.s32.totalorder %s51, %s52
      %p61 = scmp.eq.s32.totalorder %s25, 0
      %p62 = por %p60, %p61
      %p63 = scmp.ne.s32.totalorder %s51, %s52
      %p64 = scmp.eq.s32.totalorder %s26, 2
      %p65 = por %p63, %p64
      %p67 = scmp.ne.s32.totalorder %s52, %s66
      %p68 = scmp.eq.s32.totalorder %s26, 0
      %p69 = por %p67, %p68
      %s71 = sadd.s32 %s70, 1
      %p74 = scmp.eq.s32.totalorder %s20, 2
      %p75 = scmp.ne.s32.totalorder %s70, %s72
      %p76 = scmp.eq.s32.totalorder %s20, 0
      %p77 = por %p75, %p76
      %p78 = scmp.ne.s32.totalorder %s70, %s72
      %p79 = scmp.eq.s32.totalorder %s25, 2
      %p80 = por %p78, %p79
      %p81 = scmp.ne.s32.totalorder %s72, %s73
      %p82 = scmp.eq.s32.totalorder %s25, 0
      %p83 = por %p81, %p82
      %p84 = scmp.ne.s32.totalorder %s72, %s73
      %p85 = scmp.eq.s32.totalorder %s26, 2
      %p86 = por %p84, %p85
      %p88 = scmp.ne.s32.totalorder %s73, %s87
      %p89 = scmp.eq.s32.totalorder %s26, 0
      %p90 = por %p88, %p89
      %s92 = sadd.s32 %s91, 1
      %p95 = scmp.eq.s32.totalorder %s20, 2
      %p96 = scmp.ne.s32.totalorder %s91, %s93
      %p97 = scmp.eq.s32.totalorder %s20, 0
      %p98 = por %p96, %p97
      %p99 = scmp.ne.s32.totalorder %s91, %s93
      %p100 = scmp.eq.s32.totalorder %s25, 2
      %p101 = por %p99, %p100
      %p102 = scmp.ne.s32.totalorder %s93, %s94
      %p103 = scmp.eq.s32.totalorder %s25, 0
      %p104 = por %p102, %p103
      %p105 = scmp.ne.s32.totalorder %s93, %s94
      %p106 = scmp.eq.s32.totalorder %s26, 2
      %p107 = por %p105, %p106
      %p109 = scmp.ne.s32.totalorder %s94, %s108
      %p110 = scmp.eq.s32.totalorder %s26, 0
      %p111 = por %p109, %p110
      %s112 = ssub.s32 %s20, %s27
      %p113 = scmp.eq.s32.totalorder %s112, 0
      %s115 = sadd.s32 %s114, 1
      %s116 = scalar_select %p113, %s114, %s115
      %p119 = pneg %p113
      %p120 = scmp.eq.s32.totalorder %s20, 2
      %p121 = por %p119, %p120
      %p122 = scmp.ne.s32.totalorder %s114, %s117
      %p123 = scmp.eq.s32.totalorder %s20, 0
      %p124 = por %p122, %p123
      %p125 = scmp.ne.s32.totalorder %s114, %s117
      %p126 = scmp.eq.s32.totalorder %s25, 2
      %p127 = por %p125, %p126
      %p128 = scmp.ne.s32.totalorder %s117, %s118
      %p129 = scmp.eq.s32.totalorder %s25, 0
      %p130 = por %p128, %p129
      %p131 = scmp.ne.s32.totalorder %s117, %s118
      %p132 = scmp.eq.s32.totalorder %s26, 2
      %p133 = por %p131, %p132
      %p135 = scmp.ne.s32.totalorder %s118, %s134
      %p136 = scmp.eq.s32.totalorder %s26, 0
      %p137 = por %p135, %p136
      %s138 = ssub.s32 %s20, %s27
      %p139 = scmp.eq.s32.totalorder %s138, 0
      %s141 = sadd.s32 %s140, 1
      %s142 = scalar_select %p139, %s140, %s141
      %p145 = pneg %p139
      %p146 = scmp.eq.s32.totalorder %s20, 2
      %p147 = por %p145, %p146
      %p148 = scmp.ne.s32.totalorder %s140, %s143
      %p149 = scmp.eq.s32.totalorder %s20, 0
      %p150 = por %p148, %p149
      %p151 = scmp.ne.s32.totalorder %s140, %s143
      %p152 = scmp.eq.s32.totalorder %s25, 2
      %p153 = por %p151, %p152
      %p154 = scmp.ne.s32.totalorder %s143, %s144
      %p155 = scmp.eq.s32.totalorder %s25, 0
      %p156 = por %p154, %p155
      %p157 = scmp.ne.s32.totalorder %s143, %s144
      %p158 = scmp.eq.s32.totalorder %s26, 2
      %p159 = por %p157, %p158
      %p161 = scmp.ne.s32.totalorder %s144, %s160
      %p162 = scmp.eq.s32.totalorder %s26, 0
      %p163 = por %p161, %p162
      %s165 = sadd.s32 %s164, 1
      %p168 = scmp.eq.s32.totalorder %s20, 2
      %p169 = scmp.ne.s32.totalorder %s164, %s166
      %p170 = scmp.eq.s32.totalorder %s20, 0
      %p171 = por %p169, %p170
      %p172 = scmp.ne.s32.totalorder %s164, %s166
      %p173 = scmp.eq.s32.totalorder %s25, 2
      %p174 = por %p172, %p173
      %p175 = scmp.ne.s32.totalorder %s166, %s167
      %p176 = scmp.eq.s32.totalorder %s25, 0
      %p177 = por %p175, %p176
      %p178 = scmp.ne.s32.totalorder %s166, %s167
      %p179 = scmp.eq.s32.totalorder %s26, 2
      %p180 = por %p178, %p179
      %p182 = scmp.ne.s32.totalorder %s167, %s181
      %p183 = scmp.eq.s32.totalorder %s26, 0
      %p184 = por %p182, %p183
      %s186 = sadd.s32 %s185, 1
      %p189 = scmp.eq.s32.totalorder %s20, 2
      %p190 = scmp.ne.s32.totalorder %s185, %s187
      %p191 = scmp.eq.s32.totalorder %s20, 0
      %p192 = por %p190, %p191
      %p193 = scmp.ne.s32.totalorder %s185, %s187
      %p194 = scmp.eq.s32.totalorder %s25, 2
      %p195 = por %p193, %p194
      %p196 = scmp.ne.s32.totalorder %s187, %s188
      %p197 = scmp.eq.s32.totalorder %s25, 0
      %p198 = por %p196, %p197
      %p199 = scmp.ne.s32.totalorder %s187, %s188
      %p200 = scmp.eq.s32.totalorder %s26, 2
      %p201 = por %p199, %p200
      %p203 = scmp.ne.s32.totalorder %s188, %s202
      %p204 = scmp.eq.s32.totalorder %s26, 0
      %p205 = por %p203, %p204
      %s207 = sadd.s32 %s206, 1
      %p210 = scmp.eq.s32.totalorder %s20, 2
      %p211 = scmp.ne.s32.totalorder %s206, %s208
      %p212 = scmp.eq.s32.totalorder %s20, 0
      %p213 = por %p211, %p212
      %p214 = scmp.ne.s32.totalorder %s206, %s208
      %p215 = scmp.eq.s32.totalorder %s25, 2
      %p216 = por %p214, %p215
      %p217 = scmp.ne.s32.totalorder %s208, %s209
      %p218 = scmp.eq.s32.totalorder %s25, 0
      %p219 = por %p217, %p218
      %p220 = scmp.ne.s32.totalorder %s208, %s209
      %p221 = scmp.eq.s32.totalorder %s26, 2
      %p222 = por %p220, %p221
      %p224 = scmp.ne.s32.totalorder %s209, %s223
      %p225 = scmp.eq.s32.totalorder %s26, 0
      %p226 = por %p224, %p225
      %s228 = sadd.s32 %s227, 1
      %p231 = scmp.eq.s32.totalorder %s20, 2
      %p232 = scmp.ne.s32.totalorder %s227, %s229
      %p233 = scmp.eq.s32.totalorder %s20, 0
      %p234 = por %p232, %p233
      %p235 = scmp.ne.s32.totalorder %s227, %s229
      %p236 = scmp.eq.s32.totalorder %s25, 2
      %p237 = por %p235, %p236
      %p238 = scmp.ne.s32.totalorder %s229, %s230
      %p239 = scmp.eq.s32.totalorder %s25, 0
      %p240 = por %p238, %p239
      %p241 = scmp.ne.s32.totalorder %s229, %s230
      %p242 = scmp.eq.s32.totalorder %s26, 2
      %p243 = por %p241, %p242
      %p245 = scmp.ne.s32.totalorder %s230, %s244
      %p246 = scmp.eq.s32.totalorder %s26, 0
      %p247 = por %p245, %p246
      %s249 = sadd.s32 %s248, 1
      %p252 = scmp.eq.s32.totalorder %s20, 2
      %p253 = scmp.ne.s32.totalorder %s248, %s250
      %p254 = scmp.eq.s32.totalorder %s20, 0
      %p255 = por %p253, %p254
      %p256 = scmp.ne.s32.totalorder %s248, %s250
      %p257 = scmp.eq.s32.totalorder %s25, 2
      %p258 = por %p256, %p257
      %p259 = scmp.ne.s32.totalorder %s250, %s251
      %p260 = scmp.eq.s32.totalorder %s25, 0
      %p261 = por %p259, %p260
      %p262 = scmp.ne.s32.totalorder %s250, %s251
      %p263 = scmp.eq.s32.totalorder %s26, 2
      %p264 = por %p262, %p263
      %p266 = scmp.ne.s32.totalorder %s251, %s265
      %p267 = scmp.eq.s32.totalorder %s26, 0
      %p268 = por %p266, %p267
      %p269 = scmp.le.s32.totalorder 1, %s20
      %p270 = scmp.lt.s32.totalorder %s20, 4
      %p271 = pnand %p269, %p270
      %p272 = pneg %p271
      // Predicated region
      $region9: #{tpu_custom_call.1} parent=5 // pred_check
        _
      $region10: #{tpu_custom_call.1} parent=5 // pred_check_branch
        %274 = sbr.rel (%p271) target = $region12
      $region11: #{tpu_custom_call.1} parent=5 // pred_region
        %s275 = ssub.s32 %s20, 1
        // Predicated region
        $region13: #{tpu_custom_call.1} parent=11 // pred_check
          %p276 = pneg %p41
        $region14: #{tpu_custom_call.1} parent=11 // pred_check_branch
          %278 = sbr.rel (%p276) target = $region16
        $region15: #{tpu_custom_call.1} parent=11 // pred_region
          _
        $region16: #{tpu_custom_call.1} parent=11 // pred_fallthru
          _
        // Predicated region
        $region17: #{tpu_custom_call.1} parent=11 // pred_check
          %p279 = pneg %p62
        $region18: #{tpu_custom_call.1} parent=11 // pred_check_branch
          %281 = sbr.rel (%p279) target = $region20
        $region19: #{tpu_custom_call.1} parent=11 // pred_region
          _
        $region20: #{tpu_custom_call.1} parent=11 // pred_fallthru
          _
        // Predicated region
        $region21: #{tpu_custom_call.1} parent=11 // pred_check
          %p282 = pneg %p83
        $region22: #{tpu_custom_call.1} parent=11 // pred_check_branch
          %284 = sbr.rel (%p282) target = $region24
        $region23: #{tpu_custom_call.1} parent=11 // pred_region
          _
        $region24: #{tpu_custom_call.1} parent=11 // pred_fallthru
          _
        // Predicated region
        $region25: #{tpu_custom_call.1} parent=11 // pred_check
          %p285 = pneg %p104
        $region26: #{tpu_custom_call.1} parent=11 // pred_check_branch
          %287 = sbr.rel (%p285) target = $region28
        $region27: #{tpu_custom_call.1} parent=11 // pred_region
          _
        $region28: #{tpu_custom_call.1} parent=11 // pred_fallthru
          _
        // Predicated region
        $region29: #{tpu_custom_call.1} parent=11 // pred_check
          %p288 = pneg %p177
        $region30: #{tpu_custom_call.1} parent=11 // pred_check_branch
          %290 = sbr.rel (%p288) target = $region32
        $region31: #{tpu_custom_call.1} parent=11 // pred_region
          _
        $region32: #{tpu_custom_call.1} parent=11 // pred_fallthru
          _
        // Predicated region
        $region33: #{tpu_custom_call.1} parent=11 // pred_check
          %p291 = pneg %p198
        $region34: #{tpu_custom_call.1} parent=11 // pred_check_branch
          %293 = sbr.rel (%p291) target = $region36
        $region35: #{tpu_custom_call.1} parent=11 // pred_region
          _
        $region36: #{tpu_custom_call.1} parent=11 // pred_fallthru
          _
        // Predicated region
        $region37: #{tpu_custom_call.1} parent=11 // pred_check
          %p294 = pneg %p219
        $region38: #{tpu_custom_call.1} parent=11 // pred_check_branch
          %296 = sbr.rel (%p294) target = $region40
        $region39: #{tpu_custom_call.1} parent=11 // pred_region
          _
        $region40: #{tpu_custom_call.1} parent=11 // pred_fallthru
          _
        // Predicated region
        $region41: #{tpu_custom_call.1} parent=11 // pred_check
          %p297 = pneg %p240
        $region42: #{tpu_custom_call.1} parent=11 // pred_check_branch
          %299 = sbr.rel (%p297) target = $region44
        $region43: #{tpu_custom_call.1} parent=11 // pred_region
          _
        $region44: #{tpu_custom_call.1} parent=11 // pred_fallthru
          _
      $region12: #{tpu_custom_call.1} parent=5 // pred_fallthru
        _
      %p300 = scmp.lt.s32.totalorder %s20, 3
      // Predicated region
      $region45: #{tpu_custom_call.1} parent=5 // pred_check
        %p301 = pneg %p300
      $region46: #{tpu_custom_call.1} parent=5 // pred_check_branch
        %303 = sbr.rel (%p301) target = $region48
      $region47: #{tpu_custom_call.1} parent=5 // pred_region
        // Predicated region
        $region49: #{tpu_custom_call.1} parent=47 // pred_check
          %p304 = pneg %p124
        $region50: #{tpu_custom_call.1} parent=47 // pred_check_branch
          %306 = sbr.rel (%p304) target = $region52
        $region51: #{tpu_custom_call.1} parent=47 // pred_region
          %s307 = sand.u32 %s114, 1
          %s308 = scalar_lea.sflag [#allocation4], %s307
          %s309 = sand.u32 %s114, 1
          %s310 = smul.addr %s309, 204
          %s311 = scalar_lea.vmem [#allocation3], %s310
          %s313 = ssub.s32 3264, 3264
          %314 = vsyncadd %s308, %s313
          %s315 = smul.addr %s20, 51
          %s316 = smul.addr %s315, 64
          %s317 = scalar_lea.hbm %s4, %s316
          %s318 = sshll.u32 %s311, 4
          %s319 = int_to_ptr.vmem [resolvable:$true] %s318
          %324 = dma.hbm_to_vmem [thread:$0]  %s317, 3264, %s319, %s308, 192, 192, 12
        $region52: #{tpu_custom_call.1} parent=47 // pred_fallthru
          _
        // Predicated region
        $region53: #{tpu_custom_call.1} parent=47 // pred_check
          %p325 = pneg %p150
        $region54: #{tpu_custom_call.1} parent=47 // pred_check_branch
          %327 = sbr.rel (%p325) target = $region56
        $region55: #{tpu_custom_call.1} parent=47 // pred_region
          %p328 = scmp.lt.s32.totalorder %s20, 2
          %s329 = scalar_select %p328, %s20, 2
          %s330 = scalar_lea.vmem %s5, %s329
        $region56: #{tpu_custom_call.1} parent=47 // pred_fallthru
          _
      $region48: #{tpu_custom_call.1} parent=5 // pred_fallthru
        _
      %p331 = scmp.le.s32.totalorder 1, %s20
      %p332 = scmp.lt.s32.totalorder %s20, 4
      %p333 = pnand %p331, %p332
      %p334 = pneg %p333
      // Predicated region
      $region57: #{tpu_custom_call.1} parent=5 // pred_check
        _
      $region58: #{tpu_custom_call.1} parent=5 // pred_check_branch
        %336 = sbr.rel (%p333) target = $region60
      $region59: #{tpu_custom_call.1} parent=5 // pred_region
        %s337 = ssub.s32 %s20, 1
        %s338 = sand.u32 %s117, 1
        %s339 = scalar_lea.sflag [#allocation4], %s338
        %s340 = sand.u32 %s117, 1
        %s341 = smul.addr %s340, 204
        %s342 = scalar_lea.vmem [#allocation3], %s341
        // Predicated region
        $region61: #{tpu_custom_call.1} parent=59 // pred_check
          %p343 = pneg %p130
        $region62: #{tpu_custom_call.1} parent=59 // pred_check_branch
          %345 = sbr.rel (%p343) target = $region64
        $region63: #{tpu_custom_call.1} parent=59 // pred_region
          %346 = dma.done %s339, 3264
        $region64: #{tpu_custom_call.1} parent=59 // pred_fallthru
          _
        %p347 = pneg %p41
        %p348 = pneg %p38
        %p349 = pneg %p62
        %p350 = pneg %p59
        %p351 = pneg %p83
        %p352 = pneg %p80
        %p353 = pneg %p104
        %p354 = pneg %p101
        %s355 = sand.u32 %s117, 1
        %s356 = scalar_lea.sflag [#allocation4], %s355
        %s357 = sand.u32 %s117, 1
        %s358 = smul.addr %s357, 204
        %s359 = scalar_lea.vmem [#allocation3], %s358
        %p360 = pneg %p130
        %p361 = pneg %p127
        %p362 = scmp.lt.s32.totalorder %s25, 2
        %s363 = scalar_select %p362, %s25, 2
        %s364 = scalar_lea.vmem %s5, %s363
        %p365 = pneg %p156
        %p366 = pneg %p153
        %p367 = pneg %p177
        %p368 = pneg %p174
        %p369 = pneg %p198
        %p370 = pneg %p195
        %p371 = pneg %p219
        %p372 = pneg %p216
        %p373 = pneg %p240
        %p374 = pneg %p237
        %p375 = pneg %p261
        %p376 = pneg %p258
        %p377 = scmp.lt.s32.totalorder %s25, 2
        %s378 = scalar_select %p377, %s25, 2
        %s379 = scalar_lea.vmem %s5, %s378
        %p381 = scmp.eq.s32.totalorder %s25, 0
        // Predicated region
        $region65: #{tpu_custom_call.1} parent=59 // pred_check
          %p382 = pneg %p381
        $region66: #{tpu_custom_call.1} parent=59 // pred_check_branch
          %384 = sbr.rel (%p382) target = $region68
        $region67: #{tpu_custom_call.1} parent=59 // pred_region
          %v385 = vld [vmem:[%s0] sm:$0xf]
          %v386 = vld [vmem:[%s0 + $0x4] sm:$0xf]
          %v387 = vld [vmem:[%s0 + $0x8] sm:$0xf]
          %v388 = vld [vmem:[%s0 + $0xc] sm:$0xf]
          %389 = vst [vmem:[#allocation2] sm:$0xf] %v385
          %390 = vst [vmem:[#allocation2 + $0x8] sm:$0xf] %v386
          %391 = vst [vmem:[#allocation2 + $0x10] sm:$0xf] %v387
          %392 = vst [vmem:[#allocation2 + $0x18] sm:$0xf] %v388
          %v393 = vld [vmem:[%s2] sm:$0xf]
          %v394 = vld [vmem:[%s2 + $0x4] sm:$0xf]
          %v395 = vld [vmem:[%s2 + $0x8] sm:$0xf]
          %v396 = vld [vmem:[%s2 + $0xc] sm:$0xf]
          %vm397 = vcmask 60416
          %398 = vst.msk [vmem:[#allocation2 + $0x4] sm:$0xf] %vm397, %v393
          %399 = vst.msk [vmem:[#allocation2 + $0xc] sm:$0xf] %vm397, %v394
          %400 = vst.msk [vmem:[#allocation2 + $0x14] sm:$0xf] %vm397, %v395
          %401 = vst.msk [vmem:[#allocation2 + $0x1c] sm:$0xf] %vm397, %v396
        $region68: #{tpu_custom_call.1} parent=59 // pred_fallthru
          _
        %v402 = vld [vmem:[#allocation2] sm:$0xff]
        %v403 = vld [vmem:[#allocation2 + $0x8] sm:$0xff]
        %v404 = vld [vmem:[#allocation2 + $0x10] sm:$0xff]
        %v405 = vld [vmem:[#allocation2 + $0x18] sm:$0xff]
        %v406 = vld [vmem:[%s342] sm:$0xff]
        %v407 = vld [vmem:[%s342 + $0x8] sm:$0xf]
        %v408 = vld [vmem:[%s342 + $0xc] sm:$0xff]
        %v409 = vld [vmem:[%s342 + $0x14] sm:$0xf]
        %v410 = vld [vmem:[%s342 + $0x18] sm:$0xff]
        %v411 = vld [vmem:[%s342 + $0x20] sm:$0xf]
        %v412 = vld [vmem:[%s342 + $0x24] sm:$0xff]
        %v413 = vld [vmem:[%s342 + $0x2c] sm:$0xf]
        %v414 = vld [vmem:[%s342 + $0x30] sm:$0xff]
        %v415 = vld [vmem:[%s342 + $0x38] sm:$0xf]
        %v416 = vld [vmem:[%s342 + $0x3c] sm:$0xff]
        %v417 = vld [vmem:[%s342 + $0x44] sm:$0xf]
        %v418 = vld [vmem:[%s342 + $0x48] sm:$0xff]
        %v419 = vld [vmem:[%s342 + $0x50] sm:$0xf]
        %v420 = vld [vmem:[%s342 + $0x54] sm:$0xff]
        %v421 = vld [vmem:[%s342 + $0x5c] sm:$0xf]
        %v422 = vld [vmem:[%s342 + $0x60] sm:$0xff]
        %v423 = vld [vmem:[%s342 + $0x68] sm:$0xf]
        %v424 = vld [vmem:[%s342 + $0x6c] sm:$0xff]
        %v425 = vld [vmem:[%s342 + $0x74] sm:$0xf]
        %v426 = vld [vmem:[%s342 + $0x78] sm:$0xff]
        %v427 = vld [vmem:[%s342 + $0x80] sm:$0xf]
        %v428 = vld [vmem:[%s342 + $0x84] sm:$0xff]
        %v429 = vld [vmem:[%s342 + $0x8c] sm:$0xf]
        %v430 = vld [vmem:[%s342 + $0x90] sm:$0xff]
        %v431 = vld [vmem:[%s342 + $0x98] sm:$0xf]
        %v432 = vld [vmem:[%s342 + $0x9c] sm:$0xff]
        %v433 = vld [vmem:[%s342 + $0xa4] sm:$0xf]
        %v434 = vld [vmem:[%s342 + $0xa8] sm:$0xff]
        %v435 = vld [vmem:[%s342 + $0xb0] sm:$0xf]
        %v436 = vld [vmem:[%s342 + $0xb4] sm:$0xff]
        %v437 = vld [vmem:[%s342 + $0xbc] sm:$0xf]
        %v438 = vld [vmem:[%s342 + $0xc0] sm:$0xff]
        %v439 = vld [vmem:[%s342 + $0xc8] sm:$0xf]
        %v444 = vunpack.c.l.b16 %v402
        %v445 = vunpack.c.h.b16 %v402
        %v446 = vunpack.c.l.b16 %v403
        %v447 = vunpack.c.h.b16 %v403
        %v448 = vunpack.c.l.b16 %v404
        %v449 = vunpack.c.h.b16 %v404
        %v450 = vunpack.c.l.b16 %v405
        %v451 = vunpack.c.h.b16 %v405
        %v452 = vpack.c.b16 %v446, %v444
        %v453 = vpack.c.b16 %v447, %v445
        %v454 = vpack.c.b16 %v450, %v448
        %v455 = vpack.c.b16 %v451, %v449
        %v492 = vunpack.c.l.b16 %v406
        %v493 = vunpack.c.h.b16 %v406
        %v494 = vunpack.c.l.b16 %v407
        %v495 = vunpack.c.l.b16 %v408
        %v496 = vunpack.c.h.b16 %v408
        %v497 = vunpack.c.l.b16 %v409
        %v498 = vunpack.c.l.b16 %v410
        %v499 = vunpack.c.h.b16 %v410
        %v500 = vunpack.c.l.b16 %v411
        %v501 = vunpack.c.l.b16 %v412
        %v502 = vunpack.c.h.b16 %v412
        %v503 = vunpack.c.l.b16 %v413
        %v504 = vunpack.c.l.b16 %v414
        %v505 = vunpack.c.h.b16 %v414
        %v506 = vunpack.c.l.b16 %v415
        %v507 = vunpack.c.l.b16 %v416
        %v508 = vunpack.c.h.b16 %v416
        %v509 = vunpack.c.l.b16 %v417
        %v510 = vunpack.c.l.b16 %v418
        %v511 = vunpack.c.h.b16 %v418
        %v512 = vunpack.c.l.b16 %v419
        %v513 = vunpack.c.l.b16 %v420
        %v514 = vunpack.c.h.b16 %v420
        %v515 = vunpack.c.l.b16 %v421
        %v516 = vunpack.c.l.b16 %v422
        %v517 = vunpack.c.h.b16 %v422
        %v518 = vunpack.c.l.b16 %v423
        %v519 = vunpack.c.l.b16 %v424
        %v520 = vunpack.c.h.b16 %v424
        %v521 = vunpack.c.l.b16 %v425
        %v522 = vunpack.c.l.b16 %v426
        %v523 = vunpack.c.h.b16 %v426
        %v524 = vunpack.c.l.b16 %v427
        %v525 = vunpack.c.l.b16 %v428
        %v526 = vunpack.c.h.b16 %v428
        %v527 = vunpack.c.l.b16 %v429
        %v528 = vunpack.c.l.b16 %v430
        %v529 = vunpack.c.h.b16 %v430
        %v530 = vunpack.c.l.b16 %v431
        %v531 = vunpack.c.l.b16 %v432
        %v532 = vunpack.c.h.b16 %v432
        %v533 = vunpack.c.l.b16 %v433
        %v534 = vunpack.c.l.b16 %v434
        %v535 = vunpack.c.h.b16 %v434
        %v536 = vunpack.c.l.b16 %v435
        %v537 = vunpack.c.l.b16 %v436
        %v538 = vunpack.c.h.b16 %v436
        %v539 = vunpack.c.l.b16 %v437
        %v540 = vunpack.c.l.b16 %v438
        %v541 = vunpack.c.h.b16 %v438
        %v542 = vunpack.c.l.b16 %v439
        %v543 = vpack.c.b16 %v495, %v492
        %v544 = vpack.c.b16 %v496, %v493
        %v545 = vpack.c.b16 %v497, %v494
        %v546 = vpack.c.b16 %v501, %v498
        %v547 = vpack.c.b16 %v502, %v499
        %v548 = vpack.c.b16 %v503, %v500
        %v549 = vpack.c.b16 %v507, %v504
        %v550 = vpack.c.b16 %v508, %v505
        %v551 = vpack.c.b16 %v509, %v506
        %v552 = vpack.c.b16 %v513, %v510
        %v553 = vpack.c.b16 %v514, %v511
        %v554 = vpack.c.b16 %v515, %v512
        %v555 = vpack.c.b16 %v519, %v516
        %v556 = vpack.c.b16 %v520, %v517
        %v557 = vpack.c.b16 %v521, %v518
        %v558 = vpack.c.b16 %v525, %v522
        %v559 = vpack.c.b16 %v526, %v523
        %v560 = vpack.c.b16 %v527, %v524
        %v561 = vpack.c.b16 %v531, %v528
        %v562 = vpack.c.b16 %v532, %v529
        %v563 = vpack.c.b16 %v533, %v530
        %v564 = vpack.c.b16 %v537, %v534
        %v565 = vpack.c.b16 %v538, %v535
        %v566 = vpack.c.b16 %v539, %v536
        %v567 = vpack.c.b16 %v540, %v540
        %v568 = vpack.c.b16 %v541, %v541
        %v569 = vpack.c.b16 %v542, %v542
        %vm594 = vcmask 64512
        %v596 = vsel %vm594, %v453, 0
        %v599 = vsel %vm594, %v455, 0
        %vm601 = vcmask 1043456
        %v603 = vsel %vm601, %v567, 0
        %v606 = vsel %vm601, %v568, 0
        %v609 = vsel %vm601, %v569, 0
        %611 = vmatprep.subr.bf16.mxu0 %v565
        %612 = vmatpush1.bf16.msra.mxu0 %v564
        %613 = vmatprep.subr.bf16.mxu0 %v562
        %614 = vmatpush1.bf16.msra.mxu0 %v561
        %615 = vmatprep.subr.bf16.mxu0 %v559
        %616 = vmatpush1.bf16.msra.mxu0 %v558
        %617 = vmatprep.subr.bf16.mxu0 %v556
        %618 = vmatpush1.bf16.msra.mxu0 %v555
        %619 = vmatprep.subr.bf16.mxu0 %v553
        %620 = vmatpush1.bf16.msra.mxu0 %v552
        %621 = vmatprep.subr.bf16.mxu0 %v550
        %622 = vmatpush1.bf16.msra.mxu0 %v549
        %623 = vmatprep.subr.bf16.mxu0 %v547
        %624 = vmatpush1.bf16.msra.mxu0 %v546
        %625 = vmatprep.subr.bf16.mxu0 %v544
        %626 = vmatpush1.bf16.msra.mxu0 %v543
        %627 = vmatprep.subr.bf16.mxu0 0
        %628 = vmatpush2.bf16.msra.mxu0 0
        %629 = vmatprep.subr.bf16.mxu0 0
        %630 = vmatpush2.bf16.msra.mxu0 0
        %631 = vmatprep.subr.bf16.mxu0 0
        %632 = vmatpush2.bf16.msra.mxu0 0
        %633 = vmatprep.subr.bf16.mxu0 0
        %634 = vmatpush2.bf16.msra.mxu0 0
        %635 = vmatprep.subr.bf16.mxu0 0
        %636 = vmatpush2.bf16.msra.mxu0 0
        %637 = vmatprep.subr.bf16.mxu0 0
        %638 = vmatpush2.bf16.msra.mxu0 0
        %639 = vmatprep.subr.bf16.mxu0 0
        %640 = vmatpush2.bf16.msra.mxu0 0
        %641 = vmatprep.subr.bf16.mxu0 %v606
        %642 = vmatpush2.bf16.msra.mxu0 %v603
        %643 = vmatprep.mubr.bf16.mxu0 %v596
        %644 = vmatmul.mubr.bf16.gmra.mxu0 %v452
        %v645 = vpop.f32.mrf.mxu0
        %v646 = vadd.f32 0.0, %v645
        %v647 = vpop.f32.mrf.mxu0
        %v648 = vadd.f32 0.0, %v647
        %v649 = vpop.f32.mrf.mxu0
        %v650 = vadd.f32 0.0, %v649
        %v651 = vpop.f32.mrf.mxu0
        %v652 = vadd.f32 0.0, %v651
        %653 = vmatprep.mubr.bf16.mxu0 %v599
        %654 = vmatmul.mubr.bf16.gmra.mxu0 %v454
        %v655 = vpop.f32.mrf.mxu0
        %v656 = vadd.f32 0.0, %v655
        %v657 = vpop.f32.mrf.mxu0
        %v658 = vadd.f32 0.0, %v657
        %v659 = vpop.f32.mrf.mxu0
        %v660 = vadd.f32 0.0, %v659
        %v661 = vpop.f32.mrf.mxu0
        %v662 = vadd.f32 0.0, %v661
        %663 = vdwg.mxu0
        %664 = vmatprep.subr.bf16.mxu0 0
        %665 = vmatpush1.bf16.msra.mxu0 %v566
        %666 = vmatprep.subr.bf16.mxu0 0
        %667 = vmatpush1.bf16.msra.mxu0 %v563
        %668 = vmatprep.subr.bf16.mxu0 0
        %669 = vmatpush1.bf16.msra.mxu0 %v560
        %670 = vmatprep.subr.bf16.mxu0 0
        %671 = vmatpush1.bf16.msra.mxu0 %v557
        %672 = vmatprep.subr.bf16.mxu0 0
        %673 = vmatpush1.bf16.msra.mxu0 %v554
        %674 = vmatprep.subr.bf16.mxu0 0
        %675 = vmatpush1.bf16.msra.mxu0 %v551
        %676 = vmatprep.subr.bf16.mxu0 0
        %677 = vmatpush1.bf16.msra.mxu0 %v548
        %678 = vmatprep.subr.bf16.mxu0 0
        %679 = vmatpush1.bf16.msra.mxu0 %v545
        %680 = vmatprep.subr.bf16.mxu0 0
        %681 = vmatpush2.bf16.msra.mxu0 0
        %682 = vmatprep.subr.bf16.mxu0 0
        %683 = vmatpush2.bf16.msra.mxu0 0
        %684 = vmatprep.subr.bf16.mxu0 0
        %685 = vmatpush2.bf16.msra.mxu0 0
        %686 = vmatprep.subr.bf16.mxu0 0
        %687 = vmatpush2.bf16.msra.mxu0 0
        %688 = vmatprep.subr.bf16.mxu0 0
        %689 = vmatpush2.bf16.msra.mxu0 0
        %690 = vmatprep.subr.bf16.mxu0 0
        %691 = vmatpush2.bf16.msra.mxu0 0
        %692 = vmatprep.subr.bf16.mxu0 0
        %693 = vmatpush2.bf16.msra.mxu0 0
        %694 = vmatprep.subr.bf16.mxu0 0
        %695 = vmatpush2.bf16.msra.mxu0 %v609
        %696 = vmatprep.mubr.bf16.mxu0 %v596
        %697 = vmatmul.mubr.bf16.gmra.mxu0 %v452
        %v698 = vpop.f32.mrf.mxu0
        %v699 = vadd.f32 0.0, %v698
        %v700 = vpop.f32.mrf.mxu0
        %v701 = vpop.f32.mrf.mxu0
        %v702 = vadd.f32 0.0, %v701
        %v703 = vpop.f32.mrf.mxu0
        %704 = vmatprep.mubr.bf16.mxu0 %v599
        %705 = vmatmul.mubr.bf16.gmra.mxu0 %v454
        %v706 = vpop.f32.mrf.mxu0
        %v707 = vadd.f32 0.0, %v706
        %v708 = vpop.f32.mrf.mxu0
        %v709 = vpop.f32.mrf.mxu0
        %v710 = vadd.f32 0.0, %v709
        %v711 = vpop.f32.mrf.mxu0
        %712 = vdwg.mxu0
        %v713 = vld [vmem:[%s1] sm:$0xf]
        %v714 = vld [vmem:[%s1 + $0x4] sm:$0xf]
        %v715 = vld [vmem:[%s1 + $0x8] sm:$0xf]
        %v716 = vld [vmem:[%s1 + $0xc] sm:$0xf]
        %v717 = vpack.c.bf16 %v652, %v648
        %v718 = vpack.c.bf16 %v662, %v658
        %v723 = vunpack.c.l.b16 %v713
        %v724 = vunpack.c.l.b16 %v714
        %v725 = vunpack.c.l.b16 %v715
        %v726 = vunpack.c.l.b16 %v716
        %v727 = vpack.c.b16 %v724, %v723
        %v728 = vpack.c.b16 %v726, %v725
        %vm729 = vcmask 261120
        %v731 = vsel %vm729, %v727, 0
        %v734 = vsel %vm729, %v728, 0
        %736 = vmatprep.subr.bf16.mxu0 0
        %737 = vmatpush1.bf16.msra.mxu0 0
        %738 = vmatprep.subr.bf16.mxu0 0
        %739 = vmatpush1.bf16.msra.mxu0 0
        %740 = vmatprep.subr.bf16.mxu0 0
        %741 = vmatpush1.bf16.msra.mxu0 0
        %742 = vmatprep.subr.bf16.mxu0 0
        %743 = vmatpush1.bf16.msra.mxu0 0
        %744 = vmatprep.subr.bf16.mxu0 0
        %745 = vmatpush1.bf16.msra.mxu0 0
        %746 = vmatprep.subr.bf16.mxu0 0
        %747 = vmatpush1.bf16.msra.mxu0 0
        %748 = vmatprep.subr.bf16.mxu0 0
        %749 = vmatpush1.bf16.msra.mxu0 %v718
        %750 = vmatprep.subr.bf16.mxu0 0
        %751 = vmatpush1.bf16.msra.mxu0 %v717
        %752 = vmatprep.subr.bf16.mxu0 0
        %753 = vmatpush2.bf16.msra.mxu0 0
        %754 = vmatprep.subr.bf16.mxu0 0
        %755 = vmatpush2.bf16.msra.mxu0 0
        %756 = vmatprep.subr.bf16.mxu0 0
        %757 = vmatpush2.bf16.msra.mxu0 0
        %758 = vmatprep.subr.bf16.mxu0 0
        %759 = vmatpush2.bf16.msra.mxu0 0
        %760 = vmatprep.subr.bf16.mxu0 0
        %761 = vmatpush2.bf16.msra.mxu0 0
        %762 = vmatprep.subr.bf16.mxu0 0
        %763 = vmatpush2.bf16.msra.mxu0 0
        %764 = vmatprep.subr.bf16.mxu0 0
        %765 = vmatpush2.bf16.msra.mxu0 0
        %766 = vmatprep.subr.bf16.mxu0 0
        %767 = vmatpush2.bf16.msra.mxu0 0
        %768 = vmatprep.mubr.bf16.mxu0 0
        %769 = vmatmul.mubr.bf16.gmra.mxu0 %v731
        %v770 = vpop.f32.mrf.mxu0
        %v771 = vadd.f32 0.0, %v770
        %v772 = vpop.f32.mrf.mxu0
        %v773 = vpop.f32.mrf.mxu0
        %v774 = vadd.f32 0.0, %v773
        %v775 = vpop.f32.mrf.mxu0
        %776 = vmatprep.mubr.bf16.mxu0 0
        %777 = vmatmul.mubr.bf16.gmra.mxu0 %v734
        %v778 = vpop.f32.mrf.mxu0
        %v779 = vadd.f32 0.0, %v778
        %v780 = vpop.f32.mrf.mxu0
        %v781 = vpop.f32.mrf.mxu0
        %v782 = vadd.f32 0.0, %v781
        %v783 = vpop.f32.mrf.mxu0
        %784 = vdwg.mxu0
        %v785 = vadd.f32 %v646, %v771
        %v786 = vadd.f32 %v650, %v774
        %v787 = vadd.f32 %v656, %v779
        %v788 = vadd.f32 %v660, %v782
        %v789 = vld [vmem:[%s379] sm:$0x1]
        %v791 = vlaneseq
        %v792 = vshrl.u32 %v791, 7
        %v793 = vsub.s32 0, %v792
        %v794 = vrot.slane %v789, %v793
        %v796 = vadd.f32 %v785, %v794
        %v797 = vadd.f32 %v786, %v794
        %v798 = vadd.f32 %v787, %v794
        %v799 = vadd.f32 %v788, %v794
        %v800 = vmax.f32 %v796, 0.0
        %v801 = vmax.f32 %v797, 0.0
        %v802 = vmax.f32 %v798, 0.0
        %v803 = vmax.f32 %v799, 0.0
        %v804 = vadd.f32 %v699, %v800
        %v805 = vadd.f32 %v702, %v801
        %v806 = vadd.f32 %v707, %v802
        %v807 = vadd.f32 %v710, %v803
        %v808 = vpack.c.bf16 %v805, %v804
        %v809 = vpack.c.bf16 %v807, %v806
        %v812 = vunpack.c.l.b16 %v808
        %v813 = vunpack.c.h.b16 %v808
        %v814 = vunpack.c.l.b16 %v809
        %v815 = vunpack.c.h.b16 %v809
        %v816 = vpack.c.b16 %v812, %v812
        %v817 = vpack.c.b16 %v813, %v813
        %v818 = vpack.c.b16 %v814, %v814
        %v819 = vpack.c.b16 %v815, %v815
        %824 = vst [vmem:[#allocation2] sm:$0xf] %v816
        %825 = vst [vmem:[#allocation2 + $0x8] sm:$0xf] %v817
        %826 = vst [vmem:[#allocation2 + $0x10] sm:$0xf] %v818
        %827 = vst [vmem:[#allocation2 + $0x18] sm:$0xf] %v819
        %p828 = scmp.eq.s32.totalorder %s25, 2
        // Predicated region
        $region69: #{tpu_custom_call.1} parent=59 // pred_check
          %p829 = pneg %p828
        $region70: #{tpu_custom_call.1} parent=59 // pred_check_branch
          %831 = sbr.rel (%p829) target = $region72
        $region71: #{tpu_custom_call.1} parent=59 // pred_region
          %v832 = vld [vmem:[#allocation2] sm:$0xff]
          %v833 = vld [vmem:[#allocation2 + $0x8] sm:$0xff]
          %v834 = vld [vmem:[#allocation2 + $0x10] sm:$0xff]
          %v835 = vld [vmem:[#allocation2 + $0x18] sm:$0xff]
          %v836 = vld [vmem:[%s3] sm:$0x1]
          %v841 = vunpack.c.l.b16 %v832
          %v842 = vunpack.c.h.b16 %v832
          %v843 = vunpack.c.l.b16 %v833
          %v844 = vunpack.c.h.b16 %v833
          %v845 = vunpack.c.l.b16 %v834
          %v846 = vunpack.c.h.b16 %v834
          %v847 = vunpack.c.l.b16 %v835
          %v848 = vunpack.c.h.b16 %v835
          %v849 = vpack.c.b16 %v843, %v841
          %v850 = vpack.c.b16 %v844, %v842
          %v851 = vpack.c.b16 %v847, %v845
          %v852 = vpack.c.b16 %v848, %v846
          %v858 = vsel %vm729, %v836, 0
          %860 = vmatprep.subr.bf16.mxu0 0
          %861 = vmatpush1.bf16.msra.mxu0 0
          %862 = vmatprep.subr.bf16.mxu0 0
          %863 = vmatpush1.bf16.msra.mxu0 0
          %864 = vmatprep.subr.bf16.mxu0 0
          %865 = vmatpush1.bf16.msra.mxu0 0
          %866 = vmatprep.subr.bf16.mxu0 0
          %867 = vmatpush1.bf16.msra.mxu0 0
          %868 = vmatprep.subr.bf16.mxu0 0
          %869 = vmatpush1.bf16.msra.mxu0 0
          %870 = vmatprep.subr.bf16.mxu0 0
          %871 = vmatpush1.bf16.msra.mxu0 0
          %872 = vmatprep.subr.bf16.mxu0 %v852
          %873 = vmatpush1.bf16.msra.mxu0 %v851
          %874 = vmatprep.subr.bf16.mxu0 %v850
          %875 = vmatpush1.bf16.msra.mxu0 %v849
          %876 = vmatprep.subr.bf16.mxu0 0
          %877 = vmatpush2.bf16.msra.mxu0 0
          %878 = vmatprep.subr.bf16.mxu0 0
          %879 = vmatpush2.bf16.msra.mxu0 0
          %880 = vmatprep.subr.bf16.mxu0 0
          %881 = vmatpush2.bf16.msra.mxu0 0
          %882 = vmatprep.subr.bf16.mxu0 0
          %883 = vmatpush2.bf16.msra.mxu0 0
          %884 = vmatprep.subr.bf16.mxu0 0
          %885 = vmatpush2.bf16.msra.mxu0 0
          %886 = vmatprep.subr.bf16.mxu0 0
          %887 = vmatpush2.bf16.msra.mxu0 0
          %888 = vmatprep.subr.bf16.mxu0 0
          %889 = vmatpush2.bf16.msra.mxu0 0
          %890 = vmatprep.subr.bf16.mxu0 0
          %891 = vmatpush2.bf16.msra.mxu0 0
          %892 = vmatprep.mubr.bf16.mxu0 0
          %893 = vmatmul.mubr.bf16.gmra.mxu0 %v858
          %v894 = vpop.f32.mrf.mxu0
          %v895 = vadd.f32 0.0, %v894
          %v896 = vpop.f32.mrf.mxu0
          %v897 = vadd.f32 0.0, %v896
          %v898 = vpop.f32.mrf.mxu0
          %v899 = vpop.f32.mrf.mxu0
          %900 = vdwg.mxu0
          %v901 = vpack.c.bf16 %v895, %v895
          %v902 = vpack.c.bf16 %v897, %v897
          %v903 = vld [vmem:[%s6] sm:$0xf]
          %v904 = vld [vmem:[%s6 + $0x4] sm:$0xf]
          %v905 = vld [vmem:[%s6 + $0x8] sm:$0xf]
          %v906 = vld [vmem:[%s6 + $0xc] sm:$0xf]
          %v907 = vld [vmem:[%s6 + $0x10] sm:$0xf]
          %v908 = vld [vmem:[%s6 + $0x14] sm:$0xf]
          %v909 = vld [vmem:[%s6 + $0x18] sm:$0xf]
          %v910 = vld [vmem:[%s6 + $0x1c] sm:$0xf]
          %v911 = vld [vmem:[%s6 + $0x20] sm:$0xf]
          %v912 = vld [vmem:[%s6 + $0x24] sm:$0xf]
          %v913 = vld [vmem:[%s6 + $0x28] sm:$0xf]
          %v914 = vld [vmem:[%s6 + $0x2c] sm:$0xf]
          %v915 = vld [vmem:[%s6 + $0x30] sm:$0xf]
          %v916 = vld [vmem:[%s6 + $0x34] sm:$0xf]
          %v917 = vld [vmem:[%s6 + $0x38] sm:$0xf]
          %v918 = vld [vmem:[%s6 + $0x3c] sm:$0xf]
          %v919 = vld [vmem:[%s6 + $0x40] sm:$0xf]
          %s920 = scalar_lea.vmem %s3, 1
          %v921 = vld [vmem:[%s920] sm:$0x1]
          %v923 = vsel %vm729, %v921, 0
          %925 = vmatprep.subr.bf16.mxu0 0
          %926 = vmatpush1.bf16.msra.mxu0 0
          %927 = vmatprep.subr.bf16.mxu0 0
          %928 = vmatpush1.bf16.msra.mxu0 0
          %929 = vmatprep.subr.bf16.mxu0 0
          %930 = vmatpush1.bf16.msra.mxu0 0
          %931 = vmatprep.subr.bf16.mxu0 0
          %932 = vmatpush1.bf16.msra.mxu0 0
          %933 = vmatprep.subr.bf16.mxu0 0
          %934 = vmatpush1.bf16.msra.mxu0 0
          %935 = vmatprep.subr.bf16.mxu0 0
          %936 = vmatpush1.bf16.msra.mxu0 0
          %937 = vmatprep.subr.bf16.mxu0 %v852
          %938 = vmatpush1.bf16.msra.mxu0 %v851
          %939 = vmatprep.subr.bf16.mxu0 %v850
          %940 = vmatpush1.bf16.msra.mxu0 %v849
          %941 = vmatprep.subr.bf16.mxu0 0
          %942 = vmatpush2.bf16.msra.mxu0 0
          %943 = vmatprep.subr.bf16.mxu0 0
          %944 = vmatpush2.bf16.msra.mxu0 0
          %945 = vmatprep.subr.bf16.mxu0 0
          %946 = vmatpush2.bf16.msra.mxu0 0
          %947 = vmatprep.subr.bf16.mxu0 0
          %948 = vmatpush2.bf16.msra.mxu0 0
          %949 = vmatprep.subr.bf16.mxu0 0
          %950 = vmatpush2.bf16.msra.mxu0 0
          %951 = vmatprep.subr.bf16.mxu0 0
          %952 = vmatpush2.bf16.msra.mxu0 0
          %953 = vmatprep.subr.bf16.mxu0 0
          %954 = vmatpush2.bf16.msra.mxu0 0
          %955 = vmatprep.subr.bf16.mxu0 0
          %956 = vmatpush2.bf16.msra.mxu0 0
          %957 = vmatprep.mubr.bf16.mxu0 0
          %958 = vmatmul.mubr.bf16.gmra.mxu0 %v923
          %v959 = vpop.f32.mrf.mxu0
          %v960 = vadd.f32 0.0, %v959
          %v961 = vpop.f32.mrf.mxu0
          %v962 = vadd.f32 0.0, %v961
          %v963 = vpop.f32.mrf.mxu0
          %v964 = vpop.f32.mrf.mxu0
          %965 = vdwg.mxu0
          %v966 = vpack.c.bf16 %v960, %v960
          %v967 = vpack.c.bf16 %v962, %v962
          %s968 = scalar_lea.vmem %s6, 68
          %v969 = vld [vmem:[%s968] sm:$0xf]
          %v970 = vld [vmem:[%s968 + $0x4] sm:$0xf]
          %v971 = vld [vmem:[%s968 + $0x8] sm:$0xf]
          %v972 = vld [vmem:[%s968 + $0xc] sm:$0xf]
          %v973 = vld [vmem:[%s968 + $0x10] sm:$0xf]
          %v974 = vld [vmem:[%s968 + $0x14] sm:$0xf]
          %v975 = vld [vmem:[%s968 + $0x18] sm:$0xf]
          %v976 = vld [vmem:[%s968 + $0x1c] sm:$0xf]
          %v977 = vld [vmem:[%s968 + $0x20] sm:$0xf]
          %v978 = vld [vmem:[%s968 + $0x24] sm:$0xf]
          %v979 = vld [vmem:[%s968 + $0x28] sm:$0xf]
          %v980 = vld [vmem:[%s968 + $0x2c] sm:$0xf]
          %v981 = vld [vmem:[%s968 + $0x30] sm:$0xf]
          %v982 = vld [vmem:[%s968 + $0x34] sm:$0xf]
          %v983 = vld [vmem:[%s968 + $0x38] sm:$0xf]
          %v984 = vld [vmem:[%s968 + $0x3c] sm:$0xf]
          %v985 = vld [vmem:[%s968 + $0x40] sm:$0xf]
          %v1003 = vunpack.c.l.b16 %v969
          %v1004 = vunpack.c.l.b16 %v970
          %v1005 = vunpack.c.l.b16 %v971
          %v1006 = vunpack.c.l.b16 %v972
          %v1007 = vunpack.c.l.b16 %v973
          %v1008 = vunpack.c.l.b16 %v974
          %v1009 = vunpack.c.l.b16 %v975
          %v1010 = vunpack.c.l.b16 %v976
          %v1011 = vunpack.c.l.b16 %v977
          %v1012 = vunpack.c.l.b16 %v978
          %v1013 = vunpack.c.l.b16 %v979
          %v1014 = vunpack.c.l.b16 %v980
          %v1015 = vunpack.c.l.b16 %v981
          %v1016 = vunpack.c.l.b16 %v982
          %v1017 = vunpack.c.l.b16 %v983
          %v1018 = vunpack.c.l.b16 %v984
          %v1019 = vunpack.c.l.b16 %v985
          %v1020 = vpack.c.b16 %v1004, %v1003
          %v1021 = vpack.c.b16 %v1006, %v1005
          %v1022 = vpack.c.b16 %v1008, %v1007
          %v1023 = vpack.c.b16 %v1010, %v1009
          %v1024 = vpack.c.b16 %v1012, %v1011
          %v1025 = vpack.c.b16 %v1014, %v1013
          %v1026 = vpack.c.b16 %v1016, %v1015
          %v1027 = vpack.c.b16 %v1018, %v1017
          %v1028 = vpack.c.b16 %v1019, %v1019
          %v1038 = vsel %vm594, %v967, 0
          %v1041 = vsel %vm601, %v1028, 0
          %1043 = vmatprep.subr.bf16.mxu0 0
          %1044 = vmatpush1.bf16.msra.mxu0 %v1027
          %1045 = vmatprep.subr.bf16.mxu0 0
          %1046 = vmatpush1.bf16.msra.mxu0 %v1026
          %1047 = vmatprep.subr.bf16.mxu0 0
          %1048 = vmatpush1.bf16.msra.mxu0 %v1025
          %1049 = vmatprep.subr.bf16.mxu0 0
          %1050 = vmatpush1.bf16.msra.mxu0 %v1024
          %1051 = vmatprep.subr.bf16.mxu0 0
          %1052 = vmatpush1.bf16.msra.mxu0 %v1023
          %1053 = vmatprep.subr.bf16.mxu0 0
          %1054 = vmatpush1.bf16.msra.mxu0 %v1022
          %1055 = vmatprep.subr.bf16.mxu0 0
          %1056 = vmatpush1.bf16.msra.mxu0 %v1021
          %1057 = vmatprep.subr.bf16.mxu0 0
          %1058 = vmatpush1.bf16.msra.mxu0 %v1020
          %1059 = vmatprep.subr.bf16.mxu0 0
          %1060 = vmatpush2.bf16.msra.mxu0 0
          %1061 = vmatprep.subr.bf16.mxu0 0
          %1062 = vmatpush2.bf16.msra.mxu0 0
          %1063 = vmatprep.subr.bf16.mxu0 0
          %1064 = vmatpush2.bf16.msra.mxu0 0
          %1065 = vmatprep.subr.bf16.mxu0 0
          %1066 = vmatpush2.bf16.msra.mxu0 0
          %1067 = vmatprep.subr.bf16.mxu0 0
          %1068 = vmatpush2.bf16.msra.mxu0 0
          %1069 = vmatprep.subr.bf16.mxu0 0
          %1070 = vmatpush2.bf16.msra.mxu0 0
          %1071 = vmatprep.subr.bf16.mxu0 0
          %1072 = vmatpush2.bf16.msra.mxu0 0
          %1073 = vmatprep.subr.bf16.mxu0 0
          %1074 = vmatpush2.bf16.msra.mxu0 %v1041
          %1075 = vmatprep.mubr.bf16.mxu0 %v1038
          %1076 = vmatmul.mubr.bf16.gmra.mxu0 %v966
          %v1077 = vpop.f32.mrf.mxu0
          %v1078 = vadd.f32 0.0, %v1077
          %v1079 = vpop.f32.mrf.mxu0
          %v1080 = vpop.f32.mrf.mxu0
          %v1081 = vpop.f32.mrf.mxu0
          %1082 = vdwg.mxu0
          %v1100 = vunpack.c.l.b16 %v903
          %v1101 = vunpack.c.l.b16 %v904
          %v1102 = vunpack.c.l.b16 %v905
          %v1103 = vunpack.c.l.b16 %v906
          %v1104 = vunpack.c.l.b16 %v907
          %v1105 = vunpack.c.l.b16 %v908
          %v1106 = vunpack.c.l.b16 %v909
          %v1107 = vunpack.c.l.b16 %v910
          %v1108 = vunpack.c.l.b16 %v911
          %v1109 = vunpack.c.l.b16 %v912
          %v1110 = vunpack.c.l.b16 %v913
          %v1111 = vunpack.c.l.b16 %v914
          %v1112 = vunpack.c.l.b16 %v915
          %v1113 = vunpack.c.l.b16 %v916
          %v1114 = vunpack.c.l.b16 %v917
          %v1115 = vunpack.c.l.b16 %v918
          %v1116 = vunpack.c.l.b16 %v919
          %v1117 = vpack.c.b16 %v1101, %v1100
          %v1118 = vpack.c.b16 %v1103, %v1102
          %v1119 = vpack.c.b16 %v1105, %v1104
          %v1120 = vpack.c.b16 %v1107, %v1106
          %v1121 = vpack.c.b16 %v1109, %v1108
          %v1122 = vpack.c.b16 %v1111, %v1110
          %v1123 = vpack.c.b16 %v1113, %v1112
          %v1124 = vpack.c.b16 %v1115, %v1114
          %v1125 = vpack.c.b16 %v1116, %v1116
          %v1135 = vsel %vm594, %v902, 0
          %v1138 = vsel %vm601, %v1125, 0
          %1140 = vmatprep.subr.bf16.mxu0 0
          %1141 = vmatpush1.bf16.msra.mxu0 %v1124
          %1142 = vmatprep.subr.bf16.mxu0 0
          %1143 = vmatpush1.bf16.msra.mxu0 %v1123
          %1144 = vmatprep.subr.bf16.mxu0 0
          %1145 = vmatpush1.bf16.msra.mxu0 %v1122
          %1146 = vmatprep.subr.bf16.mxu0 0
          %1147 = vmatpush1.bf16.msra.mxu0 %v1121
          %1148 = vmatprep.subr.bf16.mxu0 0
          %1149 = vmatpush1.bf16.msra.mxu0 %v1120
          %1150 = vmatprep.subr.bf16.mxu0 0
          %1151 = vmatpush1.bf16.msra.mxu0 %v1119
          %1152 = vmatprep.subr.bf16.mxu0 0
          %1153 = vmatpush1.bf16.msra.mxu0 %v1118
          %1154 = vmatprep.subr.bf16.mxu0 0
          %1155 = vmatpush1.bf16.msra.mxu0 %v1117
          %1156 = vmatprep.subr.bf16.mxu0 0
          %1157 = vmatpush2.bf16.msra.mxu0 0
          %1158 = vmatprep.subr.bf16.mxu0 0
          %1159 = vmatpush2.bf16.msra.mxu0 0
          %1160 = vmatprep.subr.bf16.mxu0 0
          %1161 = vmatpush2.bf16.msra.mxu0 0
          %1162 = vmatprep.subr.bf16.mxu0 0
          %1163 = vmatpush2.bf16.msra.mxu0 0
          %1164 = vmatprep.subr.bf16.mxu0 0
          %1165 = vmatpush2.bf16.msra.mxu0 0
          %1166 = vmatprep.subr.bf16.mxu0 0
          %1167 = vmatpush2.bf16.msra.mxu0 0
          %1168 = vmatprep.subr.bf16.mxu0 0
          %1169 = vmatpush2.bf16.msra.mxu0 0
          %1170 = vmatprep.subr.bf16.mxu0 0
          %1171 = vmatpush2.bf16.msra.mxu0 %v1138
          %1172 = vmatprep.mubr.bf16.mxu0 %v1135
          %1173 = vmatmul.mubr.bf16.gmra.mxu0 %v901
          %v1174 = vpop.f32.mrf.mxu0
          %v1175 = vadd.f32 %v1078, %v1174
          %v1176 = vpop.f32.mrf.mxu0
          %v1177 = vpop.f32.mrf.mxu0
          %v1178 = vpop.f32.mrf.mxu0
          %1179 = vdwg.mxu0
          %s1180 = scalar_lea.vmem %s3, 2
          %v1181 = vld [vmem:[%s1180] sm:$0x1]
          %v1183 = vsel %vm729, %v1181, 0
          %1185 = vmatprep.subr.bf16.mxu0 0
          %1186 = vmatpush1.bf16.msra.mxu0 0
          %1187 = vmatprep.subr.bf16.mxu0 0
          %1188 = vmatpush1.bf16.msra.mxu0 0
          %1189 = vmatprep.subr.bf16.mxu0 0
          %1190 = vmatpush1.bf16.msra.mxu0 0
          %1191 = vmatprep.subr.bf16.mxu0 0
          %1192 = vmatpush1.bf16.msra.mxu0 0
          %1193 = vmatprep.subr.bf16.mxu0 0
          %1194 = vmatpush1.bf16.msra.mxu0 0
          %1195 = vmatprep.subr.bf16.mxu0 0
          %1196 = vmatpush1.bf16.msra.mxu0 0
          %1197 = vmatprep.subr.bf16.mxu0 %v852
          %1198 = vmatpush1.bf16.msra.mxu0 %v851
          %1199 = vmatprep.subr.bf16.mxu0 %v850
          %1200 = vmatpush1.bf16.msra.mxu0 %v849
          %1201 = vmatprep.subr.bf16.mxu0 0
          %1202 = vmatpush2.bf16.msra.mxu0 0
          %1203 = vmatprep.subr.bf16.mxu0 0
          %1204 = vmatpush2.bf16.msra.mxu0 0
          %1205 = vmatprep.subr.bf16.mxu0 0
          %1206 = vmatpush2.bf16.msra.mxu0 0
          %1207 = vmatprep.subr.bf16.mxu0 0
          %1208 = vmatpush2.bf16.msra.mxu0 0
          %1209 = vmatprep.subr.bf16.mxu0 0
          %1210 = vmatpush2.bf16.msra.mxu0 0
          %1211 = vmatprep.subr.bf16.mxu0 0
          %1212 = vmatpush2.bf16.msra.mxu0 0
          %1213 = vmatprep.subr.bf16.mxu0 0
          %1214 = vmatpush2.bf16.msra.mxu0 0
          %1215 = vmatprep.subr.bf16.mxu0 0
          %1216 = vmatpush2.bf16.msra.mxu0 0
          %1217 = vmatprep.mubr.bf16.mxu0 0
          %1218 = vmatmul.mubr.bf16.gmra.mxu0 %v1183
          %v1219 = vpop.f32.mrf.mxu0
          %v1220 = vadd.f32 0.0, %v1219
          %v1221 = vpop.f32.mrf.mxu0
          %v1222 = vadd.f32 0.0, %v1221
          %v1223 = vpop.f32.mrf.mxu0
          %v1224 = vpop.f32.mrf.mxu0
          %1225 = vdwg.mxu0
          %v1226 = vpack.c.bf16 %v1220, %v1220
          %v1227 = vpack.c.bf16 %v1222, %v1222
          %s1228 = scalar_lea.vmem %s6, 136
          %v1229 = vld [vmem:[%s1228] sm:$0xf]
          %v1230 = vld [vmem:[%s1228 + $0x4] sm:$0xf]
          %v1231 = vld [vmem:[%s1228 + $0x8] sm:$0xf]
          %v1232 = vld [vmem:[%s1228 + $0xc] sm:$0xf]
          %v1233 = vld [vmem:[%s1228 + $0x10] sm:$0xf]
          %v1234 = vld [vmem:[%s1228 + $0x14] sm:$0xf]
          %v1235 = vld [vmem:[%s1228 + $0x18] sm:$0xf]
          %v1236 = vld [vmem:[%s1228 + $0x1c] sm:$0xf]
          %v1237 = vld [vmem:[%s1228 + $0x20] sm:$0xf]
          %v1238 = vld [vmem:[%s1228 + $0x24] sm:$0xf]
          %v1239 = vld [vmem:[%s1228 + $0x28] sm:$0xf]
          %v1240 = vld [vmem:[%s1228 + $0x2c] sm:$0xf]
          %v1241 = vld [vmem:[%s1228 + $0x30] sm:$0xf]
          %v1242 = vld [vmem:[%s1228 + $0x34] sm:$0xf]
          %v1243 = vld [vmem:[%s1228 + $0x38] sm:$0xf]
          %v1244 = vld [vmem:[%s1228 + $0x3c] sm:$0xf]
          %v1245 = vld [vmem:[%s1228 + $0x40] sm:$0xf]
          %v1263 = vunpack.c.l.b16 %v1229
          %v1264 = vunpack.c.l.b16 %v1230
          %v1265 = vunpack.c.l.b16 %v1231
          %v1266 = vunpack.c.l.b16 %v1232
          %v1267 = vunpack.c.l.b16 %v1233
          %v1268 = vunpack.c.l.b16 %v1234
          %v1269 = vunpack.c.l.b16 %v1235
          %v1270 = vunpack.c.l.b16 %v1236
          %v1271 = vunpack.c.l.b16 %v1237
          %v1272 = vunpack.c.l.b16 %v1238
          %v1273 = vunpack.c.l.b16 %v1239
          %v1274 = vunpack.c.l.b16 %v1240
          %v1275 = vunpack.c.l.b16 %v1241
          %v1276 = vunpack.c.l.b16 %v1242
          %v1277 = vunpack.c.l.b16 %v1243
          %v1278 = vunpack.c.l.b16 %v1244
          %v1279 = vunpack.c.l.b16 %v1245
          %v1280 = vpack.c.b16 %v1264, %v1263
          %v1281 = vpack.c.b16 %v1266, %v1265
          %v1282 = vpack.c.b16 %v1268, %v1267
          %v1283 = vpack.c.b16 %v1270, %v1269
          %v1284 = vpack.c.b16 %v1272, %v1271
          %v1285 = vpack.c.b16 %v1274, %v1273
          %v1286 = vpack.c.b16 %v1276, %v1275
          %v1287 = vpack.c.b16 %v1278, %v1277
          %v1288 = vpack.c.b16 %v1279, %v1279
          %v1298 = vsel %vm594, %v1227, 0
          %v1301 = vsel %vm601, %v1288, 0
          %1303 = vmatprep.subr.bf16.mxu0 0
          %1304 = vmatpush1.bf16.msra.mxu0 %v1287
          %1305 = vmatprep.subr.bf16.mxu0 0
          %1306 = vmatpush1.bf16.msra.mxu0 %v1286
          %1307 = vmatprep.subr.bf16.mxu0 0
          %1308 = vmatpush1.bf16.msra.mxu0 %v1285
          %1309 = vmatprep.subr.bf16.mxu0 0
          %1310 = vmatpush1.bf16.msra.mxu0 %v1284
          %1311 = vmatprep.subr.bf16.mxu0 0
          %1312 = vmatpush1.bf16.msra.mxu0 %v1283
          %1313 = vmatprep.subr.bf16.mxu0 0
          %1314 = vmatpush1.bf16.msra.mxu0 %v1282
          %1315 = vmatprep.subr.bf16.mxu0 0
          %1316 = vmatpush1.bf16.msra.mxu0 %v1281
          %1317 = vmatprep.subr.bf16.mxu0 0
          %1318 = vmatpush1.bf16.msra.mxu0 %v1280
          %1319 = vmatprep.subr.bf16.mxu0 0
          %1320 = vmatpush2.bf16.msra.mxu0 0
          %1321 = vmatprep.subr.bf16.mxu0 0
          %1322 = vmatpush2.bf16.msra.mxu0 0
          %1323 = vmatprep.subr.bf16.mxu0 0
          %1324 = vmatpush2.bf16.msra.mxu0 0
          %1325 = vmatprep.subr.bf16.mxu0 0
          %1326 = vmatpush2.bf16.msra.mxu0 0
          %1327 = vmatprep.subr.bf16.mxu0 0
          %1328 = vmatpush2.bf16.msra.mxu0 0
          %1329 = vmatprep.subr.bf16.mxu0 0
          %1330 = vmatpush2.bf16.msra.mxu0 0
          %1331 = vmatprep.subr.bf16.mxu0 0
          %1332 = vmatpush2.bf16.msra.mxu0 0
          %1333 = vmatprep.subr.bf16.mxu0 0
          %1334 = vmatpush2.bf16.msra.mxu0 %v1301
          %1335 = vmatprep.mubr.bf16.mxu0 %v1298
          %1336 = vmatmul.mubr.bf16.gmra.mxu0 %v1226
          %v1337 = vpop.f32.mrf.mxu0
          %v1338 = vadd.f32 0.0, %v1337
          %v1339 = vpop.f32.mrf.mxu0
          %v1340 = vpop.f32.mrf.mxu0
          %v1341 = vpop.f32.mrf.mxu0
          %1342 = vdwg.mxu0
          %v1343 = vadd.f32 %v1175, %v1338
          %v1344 = vld [vmem:[%s7] sm:$0x1]
          %v1346 = vlaneseq
          %v1347 = vshrl.u32 %v1346, 7
          %v1348 = vsub.s32 0, %v1347
          %v1349 = vrot.slane %v1344, %v1348
          %v1351 = vadd.f32 %v1343, %v1349
          %v1352 = vmax.f32 %v1351, 0.0
          %v1353 = vpack.c.bf16 %v1352, %v1352
          %v1354 = vld [vmem:[%s8] sm:$0xf]
          %v1355 = vld [vmem:[%s8 + $0x4] sm:$0xf]
          %v1356 = vld [vmem:[%s8 + $0x8] sm:$0xf]
          %v1357 = vld [vmem:[%s8 + $0xc] sm:$0xf]
          %v1358 = vld [vmem:[%s9] sm:$0x1]
          %v1360 = vlaneseq
          %v1361 = vshrl.u32 %v1360, 7
          %v1362 = vsub.s32 0, %v1361
          %v1363 = vrot.slane %v1358, %v1362
          %v1369 = vunpack.c.l.b16 %v1354
          %v1370 = vunpack.c.l.b16 %v1355
          %v1371 = vunpack.c.l.b16 %v1356
          %v1372 = vunpack.c.l.b16 %v1357
          %v1373 = vpack.c.b16 %v1370, %v1369
          %v1374 = vpack.c.b16 %v1372, %v1371
          %v1378 = vsel %vm729, %v1353, 0
          %1380 = vmatprep.subr.bf16.mxu0 0
          %1381 = vmatpush1.bf16.msra.mxu0 0
          %1382 = vmatprep.subr.bf16.mxu0 0
          %1383 = vmatpush1.bf16.msra.mxu0 0
          %1384 = vmatprep.subr.bf16.mxu0 0
          %1385 = vmatpush1.bf16.msra.mxu0 0
          %1386 = vmatprep.subr.bf16.mxu0 0
          %1387 = vmatpush1.bf16.msra.mxu0 0
          %1388 = vmatprep.subr.bf16.mxu0 0
          %1389 = vmatpush1.bf16.msra.mxu0 0
          %1390 = vmatprep.subr.bf16.mxu0 0
          %1391 = vmatpush1.bf16.msra.mxu0 0
          %1392 = vmatprep.subr.bf16.mxu0 0
          %1393 = vmatpush1.bf16.msra.mxu0 %v1374
          %1394 = vmatprep.subr.bf16.mxu0 0
          %1395 = vmatpush1.bf16.msra.mxu0 %v1373
          %1396 = vmatprep.subr.bf16.mxu0 0
          %1397 = vmatpush2.bf16.msra.mxu0 0
          %1398 = vmatprep.subr.bf16.mxu0 0
          %1399 = vmatpush2.bf16.msra.mxu0 0
          %1400 = vmatprep.subr.bf16.mxu0 0
          %1401 = vmatpush2.bf16.msra.mxu0 0
          %1402 = vmatprep.subr.bf16.mxu0 0
          %1403 = vmatpush2.bf16.msra.mxu0 0
          %1404 = vmatprep.subr.bf16.mxu0 0
          %1405 = vmatpush2.bf16.msra.mxu0 0
          %1406 = vmatprep.subr.bf16.mxu0 0
          %1407 = vmatpush2.bf16.msra.mxu0 0
          %1408 = vmatprep.subr.bf16.mxu0 0
          %1409 = vmatpush2.bf16.msra.mxu0 0
          %1410 = vmatprep.subr.bf16.mxu0 0
          %1411 = vmatpush2.bf16.msra.mxu0 0
          %1412 = vmatprep.mubr.bf16.mxu0 0
          %1413 = vmatmul.mubr.bf16.gmra.mxu0 %v1378
          %v1414 = vpop.f32.mrf.mxu0
          %v1415 = vadd.f32 %v1363, %v1414
          %v1416 = vpop.f32.mrf.mxu0
          %v1417 = vpop.f32.mrf.mxu0
          %v1418 = vpop.f32.mrf.mxu0
          %1419 = vdwg.mxu0
          %vm1420 = vcmask 58368
          %1421 = vst.msk [vmem:[#allocation6] sm:$0x3] %vm1420, %v1415
        $region72: #{tpu_custom_call.1} parent=59 // pred_fallthru
          _
        // Predicated region
        $region73: #{tpu_custom_call.1} parent=59 // pred_check
          %p1422 = pneg %p258
        $region74: #{tpu_custom_call.1} parent=59 // pred_check_branch
          %1424 = sbr.rel (%p1422) target = $region76
        $region75: #{tpu_custom_call.1} parent=59 // pred_region
          %s1426 = ssub.s32 32, 32
          %1427 = vsyncadd [#allocation5], %s1426
          %s1429 = sshll.u32 [#allocation6], 4
          %s1430 = int_to_ptr.vmem [resolvable:$true] %s1429
          %1432 = dma.vmem_to_hbm [thread:$0]  %s1430, 32, %s10, [#allocation5]
        $region76: #{tpu_custom_call.1} parent=59 // pred_fallthru
          _
        // Predicated region
        $region77: #{tpu_custom_call.1} parent=59 // pred_check
          %p1433 = pneg %p258
        $region78: #{tpu_custom_call.1} parent=59 // pred_check_branch
          %1435 = sbr.rel (%p1433) target = $region80
        $region79: #{tpu_custom_call.1} parent=59 // pred_region
          %1436 = dma.done [#allocation5], 32
        $region80: #{tpu_custom_call.1} parent=59 // pred_fallthru
          _
      $region60: #{tpu_custom_call.1} parent=5 // pred_fallthru
        _
      %p1437 = scmp.le.s32.totalorder 2, %s20
      // Predicated region
      $region81: #{tpu_custom_call.1} parent=5 // pred_check
        %p1438 = pneg %p1437
      $region82: #{tpu_custom_call.1} parent=5 // pred_check_branch
        %1440 = sbr.rel (%p1438) target = $region84
      $region83: #{tpu_custom_call.1} parent=5 // pred_region
        %s1441 = ssub.s32 %s20, 2
      $region84: #{tpu_custom_call.1} parent=5 // pred_fallthru
        _
    $region6: #{tpu_custom_call.1} parent=1 // loop_footer
      %s24 = sadd.s32 1, %s20
    $region7: #{tpu_custom_call.1} parent=1 // loop_footer_branch
      %19 = sbr.rel target = $region3
    $region8: #{tpu_custom_call.1} parent=1 // loop_exit
      _
    %1442 = vsyncpa [#allocation4], 1
    %s1443 = scalar_lea.sflag [#allocation4], 1
    %1444 = vsyncpa %s1443, 1
    %1445 = vsyncpa [#allocation5], 1
    %s1446 = scalar_lea.sflag [#allocation5], 1
    %1447 = vsyncpa %s1446, 1

</llo_original>
